<compile_context>
chip_gen: v6e
topology: v6e:2x2x1
jax: 0.10.0
libtpu: 0.0.40
codegen_flags: <defaults>
</compile_context>

<pallas_src>
import functools

import jax
import jax.numpy as jnp
import numpy as np
from jax.experimental import pallas as pl
from jax.experimental.pallas import tpu as pltpu


def convlstm_cell_kernel(xk_ref, c_ref, w_ref, b_ref, out_ref):
    # xk_ref : (Mb, Kp)      full-im2col input rows for this band (zero-padded K)
    # c_ref  : (Mb, hid)     current cell state rows
    # w_ref  : (Kp, 4*hid)   conv weight as a single (K, 4*hid) matrix (zero-padded K)
    # b_ref  : (1, 4*hid)
    # out_ref: (Mb, 4*hid)   lanes [0:hid)=h_next, [hid:2*hid)=c_next, rest filler
    hid = c_ref.shape[1]

    # Whole conv == one MXU matmul (K is already padded to a multiple of 128).
    acc = jnp.dot(xk_ref[...], w_ref[...], preferred_element_type=jnp.float32)
    acc = acc + b_ref[...].astype(jnp.float32)

    # Full-width gate activation with a single EUP tanh pass:
    #   lanes [0, 3*hid):     sigmoid(x) = 0.5 * tanh(0.5*x) + 0.5   (i, f, o)
    #   lanes [3*hid, 4*hid): tanh(x)                                 (g)
    four_hid = 4 * hid
    lane = jax.lax.broadcasted_iota(jnp.int32, (1, four_hid), 1)
    scale = jnp.where(lane < 3 * hid, 0.5, 1.0).astype(jnp.float32)
    shift = jnp.where(lane < 3 * hid, 0.5, 0.0).astype(jnp.float32)
    act = jnp.tanh(acc * scale) * scale + shift                 # (Mb, 4*hid)

    i_g = act[:, 0:hid]
    f_g = act[:, hid:2 * hid]
    o_g = act[:, 2 * hid:3 * hid]
    g_g = act[:, 3 * hid:4 * hid]

    c_cur = c_ref[...].astype(jnp.float32)
    c_next = f_g * c_cur + i_g * g_g
    h_next = o_g * jnp.tanh(c_next)

    # One unmasked full-width lane-dense store (no masked partial vst); the
    # last 2*hid lanes are don't-care filler discarded by the wrapper.
    out_ref[...] = jnp.concatenate(
        [h_next, c_next, act[:, 2 * hid:]], axis=-1).astype(out_ref.dtype)


def _default_num_row_bands():
    # v7x has 2 TensorCores per chip -> 2 parallel bands keep both busy.
    # v5e / v6e are single-TC: one grid step avoids doubled per-step overhead.
    try:
        kind = jax.devices()[0].device_kind.lower()
    except Exception:
        return 1
    return 2 if "v7" in kind else 1


def conv_lstm_cell_forward(x, h_cur, c_cur, weight, bias, kernel_size,
                           conv_dtype=jnp.bfloat16, num_row_bands=None):
    """ConvLSTMCell.forward.  x/h_cur/c_cur are NCHW, weight OIHW, bias (4*hid,).

    conv_dtype: dtype of the MXU matmul operands.  bfloat16 (default) is
    MXU-native on v5e/v6e/v7x (~3-6x over emulated f32) and halves input DMA;
    accumulation is always f32.  Pass jnp.float32 for 1e-5-level exactness.
    For a bias=False module, pass jnp.zeros((4*hid,)) as `bias`.
    """
    B, cin, H, W = x.shape
    hid = h_cur.shape[1]
    kh, kw = kernel_size
    # TODO(synk): even kernel sizes change the PyTorch output spatial size
    # (padding=k//2 is only "SAME" for odd k); only odd kernels supported here.
    assert kh % 2 == 1 and kw % 2 == 1, "ConvLSTM kernels must be odd-sized"
    ph, pw = kh // 2, kw // 2
    C = cin + hid
    K = kh * kw * C
    Kp = ((K + 127) // 128) * 128          # pad contraction depth to 128 lanes

    # --- XLA-side plumbing (kept NCHW at the interface to match the module) ---
    # NCHW -> NHWC, concat([x, h]), SAME zero-pad, full im2col, K zero-pad.
    x_nhwc = jnp.transpose(x, (0, 2, 3, 1))
    h_nhwc = jnp.transpose(h_cur, (0, 2, 3, 1))
    combined = jnp.concatenate([x_nhwc, h_nhwc], axis=-1)            # (B,H,W,C)
    padded = jnp.pad(combined, ((0, 0), (ph, ph), (pw, pw), (0, 0)))
    # Full im2col: channel order (dy major, dx, c minor) matches the weight
    # flattening below.  K = kh*kw*C.
    xk = jnp.concatenate(
        [padded[:, dy:dy + H, dx:dx + W, :]
         for dy in range(kh) for dx in range(kw)], axis=-1)          # (B,H,W,K)
    xk = xk.reshape(B * H * W, K)
    xk = jnp.pad(xk, ((0, 0), (0, Kp - K))).astype(conv_dtype)       # (M, Kp)

    # OIHW -> (kh, kw, C, 4*hid) -> (K, 4*hid); zero rows for the padded K.
    w_k = jnp.transpose(weight, (2, 3, 1, 0)).reshape(K, 4 * hid)
    w_k = jnp.pad(w_k, ((0, Kp - K), (0, 0))).astype(conv_dtype)     # (Kp, 4*hid)
    b2d = bias.reshape(1, 4 * hid).astype(jnp.float32)
    c_flat = jnp.transpose(c_cur, (0, 2, 3, 1)).reshape(B * H * W, hid)

    # --- Grid: split the M = B*H*W rows into parallel bands (v7x megacore). ---
    M = B * H * W
    if num_row_bands is None:
        num_row_bands = _default_num_row_bands()
    while num_row_bands > 1 and (M % (num_row_bands * 8)) != 0:
        num_row_bands -= 1
    Mb = M // num_row_bands

    grid_spec = pltpu.PrefetchScalarGridSpec(
        num_scalar_prefetch=0,
        grid=(num_row_bands,),
        in_specs=[
            pl.BlockSpec((Mb, Kp), lambda i: (i, 0)),
            pl.BlockSpec((Mb, hid), lambda i: (i, 0)),
            pl.BlockSpec((Kp, 4 * hid), lambda i: (0, 0)),
            pl.BlockSpec((1, 4 * hid), lambda i: (0, 0)),
        ],
        out_specs=pl.BlockSpec((Mb, 4 * hid), lambda i: (i, 0)),
    )

    packed = pl.pallas_call(
        convlstm_cell_kernel,
        out_shape=jax.ShapeDtypeStruct((M, 4 * hid), x.dtype),
        grid_spec=grid_spec,
        compiler_params=pltpu.CompilerParams(
            dimension_semantics=("parallel",)),
    )(xk, c_flat, w_k, b2d)

    # Note: when scaling H/W/hid, add an H-band grid axis sized against v7x's
    # 64 MiB VMEM (32 MiB scoped default) and shrink the output to 2*hid lanes
    # once hid >= 64 so stores stay unmasked without the filler lanes.
    h_next = packed[:, 0:hid].reshape(B, H, W, hid)
    c_next = packed[:, hid:2 * hid].reshape(B, H, W, hid)
    return (jnp.transpose(h_next, (0, 3, 1, 2)),
            jnp.transpose(c_next, (0, 3, 1, 2)))


def ref_forward(x, h_cur, c_cur, weight, bias):
    """Pure-JAX reference matching the PyTorch module semantics (NCHW)."""
    combined = jnp.concatenate([x, h_cur], axis=1)
    conv = jax.lax.conv_general_dilated(
        combined, weight, window_strides=(1, 1), padding="SAME",
        dimension_numbers=("NCHW", "OIHW", "NCHW"))
    conv = conv + bias[None, :, None, None]
    cc_i, cc_f, cc_o, cc_g = jnp.split(conv, 4, axis=1)
    i = jax.nn.sigmoid(cc_i)
    f = jax.nn.sigmoid(cc_f)
    o = jax.nn.sigmoid(cc_o)
    g = jnp.tanh(cc_g)
    c_next = f * c_cur + i * g
    h_next = o * jnp.tanh(c_next)
    return h_next, c_next


if __name__ == "__main__":
    # Module hyper-params (small, consistent with the PyTorch __init__).
    B, input_dim, hidden_dim = 2, 4, 32
    H, W = 16, 16
    kernel_size = (3, 3)

    key = jax.random.PRNGKey(0)
    k_x, k_h, k_c, k_w, k_b = jax.random.split(key, 5)

    x = jax.random.normal(k_x, (B, input_dim, H, W), dtype=jnp.float32)
    h_cur = jax.random.normal(k_h, (B, hidden_dim, H, W), dtype=jnp.float32)
    c_cur = jax.random.normal(k_c, (B, hidden_dim, H, W), dtype=jnp.float32)

    # Deterministic synthetic parameters: Conv2d(in=input_dim+hidden_dim,
    # out=4*hidden_dim, kernel=3x3, bias=True), scaled like PyTorch fan-in init.
    cin_tot = input_dim + hidden_dim
    fan_in = cin_tot * kernel_size[0] * kernel_size[1]
    bound = 1.0 / np.sqrt(fan_in)
    weight = jax.random.uniform(k_w, (4 * hidden_dim, cin_tot, *kernel_size),
                                minval=-bound, maxval=bound, dtype=jnp.float32)
    bias = jax.random.uniform(k_b, (4 * hidden_dim,),
                              minval=-bound, maxval=bound, dtype=jnp.float32)

    fwd = jax.jit(conv_lstm_cell_forward,
                  static_argnames=("kernel_size", "conv_dtype", "num_row_bands"))

    h_ref, c_ref_out = ref_forward(x, h_cur, c_cur, weight, bias)

    # Fast path (default): bf16 MXU operands, f32 accumulation.
    h_bf16, c_bf16 = fwd(x, h_cur, c_cur, weight, bias, kernel_size)
    jax.block_until_ready((h_bf16, c_bf16))
    np.testing.assert_allclose(np.asarray(h_bf16), np.asarray(h_ref),
                               rtol=3e-2, atol=3e-2)
    np.testing.assert_allclose(np.asarray(c_bf16), np.asarray(c_ref_out),
                               rtol=3e-2, atol=3e-2)

    # Exactness path: f32 MXU operands, tight tolerance.
    h_f32, c_f32 = fwd(x, h_cur, c_cur, weight, bias, kernel_size,
                       conv_dtype=jnp.float32)
    jax.block_until_ready((h_f32, c_f32))
    np.testing.assert_allclose(np.asarray(h_f32), np.asarray(h_ref),
                               rtol=1e-5, atol=2e-5)
    np.testing.assert_allclose(np.asarray(c_f32), np.asarray(c_ref_out),
                               rtol=1e-5, atol=2e-5)

    print("KERNEL_OK")
</pallas_src>

<mosaic_0001>
module attributes {stable_mosaic.version = 11 : i64} {
  func.func @convlstm_cell_kernel(%arg0: i32, %arg1: memref<512x384xbf16, #tpu.memory_space<vmem>>, %arg2: memref<512x32xf32, #tpu.memory_space<vmem>>, %arg3: memref<384x128xbf16, #tpu.memory_space<vmem>>, %arg4: memref<1x128xf32, #tpu.memory_space<vmem>>, %arg5: memref<512x128xf32, #tpu.memory_space<vmem>>) attributes {dimension_semantics = [#tpu.dimension_semantics<parallel>], iteration_bounds = array<i64: 1>, scalar_prefetch = 0 : i64, scratch_operands = 0 : i64, tpu.core_type = #tpu.core_type<tc>, window_params = [{transform_indices = @transform_0, window_bounds = array<i64: 512, 384>}, {transform_indices = @transform_1, window_bounds = array<i64: 512, 32>}, {pipeline_mode = #tpu.pipeline_mode<synchronous>, transform_indices = @transform_2, window_bounds = array<i64: 384, 128>}, {pipeline_mode = #tpu.pipeline_mode<synchronous>, transform_indices = @transform_3, window_bounds = array<i64: 1, 128>}, {transform_indices = @transform_4, window_bounds = array<i64: 512, 128>}]} {
    %c0 = arith.constant 0 : index
    %c0_0 = arith.constant 0 : index
    %0 = vector.load %arg1[%c0, %c0_0] : memref<512x384xbf16, #tpu.memory_space<vmem>>, vector<512x384xbf16>
    %c0_1 = arith.constant 0 : index
    %c0_2 = arith.constant 0 : index
    %1 = vector.load %arg3[%c0_1, %c0_2] : memref<384x128xbf16, #tpu.memory_space<vmem>>, vector<384x128xbf16>
    %cst = arith.constant dense<0.000000e+00> : vector<512x128xf32>
    %2 = tpu.matmul %0, %1, %cst {dimension_numbers = #tpu.dot_dimension_numbers<[1], [0], [0], [1], [0, 0, 1, 1], [], []>} : vector<512x384xbf16>, vector<384x128xbf16>, vector<512x128xf32> -> vector<512x128xf32>
    %c0_3 = arith.constant 0 : index
    %c0_4 = arith.constant 0 : index
    %3 = vector.load %arg4[%c0_3, %c0_4] : memref<1x128xf32, #tpu.memory_space<vmem>>, vector<1x128xf32>
    %4 = vector.broadcast %3 : vector<1x128xf32> to vector<512x128xf32>
    %5 = arith.addf %2, %4 : vector<512x128xf32>
    %6 = tpu.iota {dimensions = array<i32: 1>} : vector<1x128xi32>
    %c96_i32 = arith.constant 96 : i32
    %7 = vector.broadcast %c96_i32 : i32 to vector<1x128xi32>
    %8 = arith.cmpi slt, %6, %7 : vector<1x128xi32>
    %cst_5 = arith.constant 5.000000e-01 : f32
    %cst_6 = arith.constant 1.000000e+00 : f32
    %9 = vector.broadcast %cst_5 : f32 to vector<1x128xf32>
    %10 = vector.broadcast %cst_6 : f32 to vector<1x128xf32>
    %11 = arith.select %8, %9, %10 : vector<1x128xi1>, vector<1x128xf32>
    %c96_i32_7 = arith.constant 96 : i32
    %12 = vector.broadcast %c96_i32_7 : i32 to vector<1x128xi32>
    %13 = arith.cmpi slt, %6, %12 : vector<1x128xi32>
    %cst_8 = arith.constant 5.000000e-01 : f32
    %cst_9 = arith.constant 0.000000e+00 : f32
    %14 = vector.broadcast %cst_8 : f32 to vector<1x128xf32>
    %15 = vector.broadcast %cst_9 : f32 to vector<1x128xf32>
    %16 = arith.select %13, %14, %15 : vector<1x128xi1>, vector<1x128xf32>
    %17 = vector.broadcast %11 : vector<1x128xf32> to vector<512x128xf32>
    %18 = arith.mulf %5, %17 : vector<512x128xf32>
    %19 = math.tanh %18 : vector<512x128xf32>
    %20 = vector.broadcast %11 : vector<1x128xf32> to vector<512x128xf32>
    %21 = arith.mulf %19, %20 : vector<512x128xf32>
    %22 = vector.broadcast %16 : vector<1x128xf32> to vector<512x128xf32>
    %23 = arith.addf %21, %22 : vector<512x128xf32>
    %24 = vector.extract_strided_slice %23 {offsets = [0, 0], sizes = [512, 32], strides = [1, 1]} : vector<512x128xf32> to vector<512x32xf32>
    %25 = vector.extract_strided_slice %23 {offsets = [0, 32], sizes = [512, 32], strides = [1, 1]} : vector<512x128xf32> to vector<512x32xf32>
    %26 = vector.extract_strided_slice %23 {offsets = [0, 64], sizes = [512, 32], strides = [1, 1]} : vector<512x128xf32> to vector<512x32xf32>
    %27 = vector.extract_strided_slice %23 {offsets = [0, 96], sizes = [512, 32], strides = [1, 1]} : vector<512x128xf32> to vector<512x32xf32>
    %c0_10 = arith.constant 0 : index
    %c0_11 = arith.constant 0 : index
    %28 = vector.load %arg2[%c0_10, %c0_11] : memref<512x32xf32, #tpu.memory_space<vmem>>, vector<512x32xf32>
    %29 = arith.mulf %25, %28 : vector<512x32xf32>
    %30 = arith.mulf %24, %27 : vector<512x32xf32>
    %31 = arith.addf %29, %30 : vector<512x32xf32>
    %32 = math.tanh %31 : vector<512x32xf32>
    %33 = arith.mulf %26, %32 : vector<512x32xf32>
    %34 = vector.extract_strided_slice %23 {offsets = [0, 64], sizes = [512, 64], strides = [1, 1]} : vector<512x128xf32> to vector<512x64xf32>
    %35 = tpu.concatenate %33, %31, %34 in 1 : vector<512x32xf32>, vector<512x32xf32>, vector<512x64xf32> -> vector<512x128xf32>
    %c0_12 = arith.constant 0 : index
    %c0_13 = arith.constant 0 : index
    %36 = vector.load %arg5[%c0_12, %c0_13] : memref<512x128xf32, #tpu.memory_space<vmem>>, vector<512x128xf32>
    tpu.vector_store %arg5[%c0_12, %c0_13], %35 {strides = array<i32>} : memref<512x128xf32, #tpu.memory_space<vmem>>, vector<512x128xf32>,
    return
  }
  func.func @transform_0(%arg0: i32) -> (i32, i32) {
    %c0_i32 = arith.constant 0 : i32
    %c0_i32_0 = arith.constant 0 : i32
    return %arg0, %c0_i32 : i32, i32
  }
  func.func @transform_1(%arg0: i32) -> (i32, i32) {
    %c0_i32 = arith.constant 0 : i32
    %c0_i32_0 = arith.constant 0 : i32
    return %arg0, %c0_i32 : i32, i32
  }
  func.func @transform_2(%arg0: i32) -> (i32, i32) {
    %c0_i32 = arith.constant 0 : i32
    %c0_i32_0 = arith.constant 0 : i32
    %c0_i32_1 = arith.constant 0 : i32
    return %c0_i32, %c0_i32_0 : i32, i32
  }
  func.func @transform_3(%arg0: i32) -> (i32, i32) {
    %c0_i32 = arith.constant 0 : i32
    %c0_i32_0 = arith.constant 0 : i32
    %c0_i32_1 = arith.constant 0 : i32
    return %c0_i32, %c0_i32_0 : i32, i32
  }
  func.func @transform_4(%arg0: i32) -> (i32, i32) {
    %c0_i32 = arith.constant 0 : i32
    %c0_i32_0 = arith.constant 0 : i32
    return %arg0, %c0_i32 : i32, i32
  }
}

</mosaic_0001>

<llo_original>
// kernel: conv_lstm_cell_forward.1
$region0: #{conv_lstm_cell_forward.1}
  #allocation0 [shape = 'u32[]', space=smem, size = 0x4, offset = 0x4, fixed_abs, tag = 'smem constant byte address 0x4 - core index']
  #allocation1 [shape = 'u32[144,128]{1,0:T(1,128)}', space=vmem, size = 0x12000, scoped, tag = 'internal scratch']
  %s0 = inlined_call_operand.vmem [shape: bf16[512,384], index: 0, kind: input, shape index: {}]
  %s1 = inlined_call_operand.vmem [shape: f32[512,32], index: 1, kind: input, shape index: {}]
  %s2 = inlined_call_operand.vmem [shape: bf16[384,128], index: 2, kind: input, shape index: {}]
  %s3 = inlined_call_operand.vmem [shape: f32[1,128], index: 3, kind: input, shape index: {}]
  %s4 = inlined_call_operand.vmem [shape: f32[512,128], index: 4, kind: output, shape index: {}]
  %s5 = sld [smem:[#allocation0]]
  $region26: #{conv_lstm_cell_forward.1} parent=0
    _
  %s7 = ssub.s32 1, %s5
  %s8 = scalar_select 0, %s7, %s5
  // Predicated region
  $region2: #{conv_lstm_cell_forward.1} parent=0 // pred_check
    _
  $region3: #{conv_lstm_cell_forward.1} parent=0 // pred_check_branch
    %10 = sbr.rel (0) target = $region5
  $region4: #{conv_lstm_cell_forward.1} parent=0 // pred_region
    _
  $region5: #{conv_lstm_cell_forward.1} parent=0 // pred_fallthru
    _
  // Predicated region
  $region6: #{conv_lstm_cell_forward.1} parent=0 // pred_check
    _
  $region7: #{conv_lstm_cell_forward.1} parent=0 // pred_check_branch
    %12 = sbr.rel (0) target = $region9
  $region8: #{conv_lstm_cell_forward.1} parent=0 // pred_region
    _
  $region9: #{conv_lstm_cell_forward.1} parent=0 // pred_fallthru
    _
  // Predicated region
  $region10: #{conv_lstm_cell_forward.1} parent=0 // pred_check
    _
  $region11: #{conv_lstm_cell_forward.1} parent=0 // pred_check_branch
    %14 = sbr.rel (0) target = $region13
  $region12: #{conv_lstm_cell_forward.1} parent=0 // pred_region
    _
  $region13: #{conv_lstm_cell_forward.1} parent=0 // pred_fallthru
    _
  // Predicated region
  $region14: #{conv_lstm_cell_forward.1} parent=0 // pred_check
    _
  $region15: #{conv_lstm_cell_forward.1} parent=0 // pred_check_branch
    %16 = sbr.rel (0) target = $region17
  $region16: #{conv_lstm_cell_forward.1} parent=0 // pred_region
    _
  $region17: #{conv_lstm_cell_forward.1} parent=0 // pred_fallthru
    _
  %v18 = vld [vmem:[%s0] sm:$0xff]
  %v19 = vld [vmem:[%s0 + $0x8] sm:$0xf]
  %v20 = vld [vmem:[%s0 + $0xc] sm:$0xff]
  %v21 = vld [vmem:[%s0 + $0x14] sm:$0xf]
  %v22 = vld [vmem:[%s0 + $0x18] sm:$0xff]
  %v23 = vld [vmem:[%s0 + $0x20] sm:$0xf]
  %v24 = vld [vmem:[%s0 + $0x24] sm:$0xff]
  %v25 = vld [vmem:[%s0 + $0x2c] sm:$0xf]
  %v26 = vld [vmem:[%s0 + $0x30] sm:$0xff]
  %v27 = vld [vmem:[%s0 + $0x38] sm:$0xf]
  %v28 = vld [vmem:[%s0 + $0x3c] sm:$0xff]
  %v29 = vld [vmem:[%s0 + $0x44] sm:$0xf]
  %v30 = vld [vmem:[%s0 + $0x48] sm:$0xff]
  %v31 = vld [vmem:[%s0 + $0x50] sm:$0xf]
  %v32 = vld [vmem:[%s0 + $0x54] sm:$0xff]
  %v33 = vld [vmem:[%s0 + $0x5c] sm:$0xf]
  %v34 = vld [vmem:[%s0 + $0x60] sm:$0xff]
  %v35 = vld [vmem:[%s0 + $0x68] sm:$0xf]
  %v36 = vld [vmem:[%s0 + $0x6c] sm:$0xff]
  %v37 = vld [vmem:[%s0 + $0x74] sm:$0xf]
  %v38 = vld [vmem:[%s0 + $0x78] sm:$0xff]
  %v39 = vld [vmem:[%s0 + $0x80] sm:$0xf]
  %v40 = vld [vmem:[%s0 + $0x84] sm:$0xff]
  %v41 = vld [vmem:[%s0 + $0x8c] sm:$0xf]
  %v42 = vld [vmem:[%s0 + $0x90] sm:$0xff]
  %v43 = vld [vmem:[%s0 + $0x98] sm:$0xf]
  %v44 = vld [vmem:[%s0 + $0x9c] sm:$0xff]
  %v45 = vld [vmem:[%s0 + $0xa4] sm:$0xf]
  %v46 = vld [vmem:[%s0 + $0xa8] sm:$0xff]
  %v47 = vld [vmem:[%s0 + $0xb0] sm:$0xf]
  %v48 = vld [vmem:[%s0 + $0xb4] sm:$0xff]
  %v49 = vld [vmem:[%s0 + $0xbc] sm:$0xf]
  %v50 = vld [vmem:[%s0 + $0xc0] sm:$0xff]
  %v51 = vld [vmem:[%s0 + $0xc8] sm:$0xf]
  %v52 = vld [vmem:[%s0 + $0xcc] sm:$0xff]
  %v53 = vld [vmem:[%s0 + $0xd4] sm:$0xf]
  %v54 = vld [vmem:[%s0 + $0xd8] sm:$0xff]
  %v55 = vld [vmem:[%s0 + $0xe0] sm:$0xf]
  %v56 = vld [vmem:[%s0 + $0xe4] sm:$0xff]
  %v57 = vld [vmem:[%s0 + $0xec] sm:$0xf]
  %v58 = vld [vmem:[%s0 + $0xf0] sm:$0xff]
  %v59 = vld [vmem:[%s0 + $0xf8] sm:$0xf]
  %v60 = vld [vmem:[%s0 + $0xfc] sm:$0xff]
  %v61 = vld [vmem:[%s0 + $0x104] sm:$0xf]
  %v62 = vld [vmem:[%s0 + $0x108] sm:$0xff]
  %v63 = vld [vmem:[%s0 + $0x110] sm:$0xf]
  %v64 = vld [vmem:[%s0 + $0x114] sm:$0xff]
  %v65 = vld [vmem:[%s0 + $0x11c] sm:$0xf]
  %v66 = vld [vmem:[%s0 + $0x120] sm:$0xff]
  %v67 = vld [vmem:[%s0 + $0x128] sm:$0xf]
  %v68 = vld [vmem:[%s0 + $0x12c] sm:$0xff]
  %v69 = vld [vmem:[%s0 + $0x134] sm:$0xf]
  %v70 = vld [vmem:[%s0 + $0x138] sm:$0xff]
  %v71 = vld [vmem:[%s0 + $0x140] sm:$0xf]
  %v72 = vld [vmem:[%s0 + $0x144] sm:$0xff]
  %v73 = vld [vmem:[%s0 + $0x14c] sm:$0xf]
  %v74 = vld [vmem:[%s0 + $0x150] sm:$0xff]
  %v75 = vld [vmem:[%s0 + $0x158] sm:$0xf]
  %v76 = vld [vmem:[%s0 + $0x15c] sm:$0xff]
  %v77 = vld [vmem:[%s0 + $0x164] sm:$0xf]
  %v78 = vld [vmem:[%s0 + $0x168] sm:$0xff]
  %v79 = vld [vmem:[%s0 + $0x170] sm:$0xf]
  %v80 = vld [vmem:[%s0 + $0x174] sm:$0xff]
  %v81 = vld [vmem:[%s0 + $0x17c] sm:$0xf]
  %v82 = vld [vmem:[%s0 + $0x180] sm:$0xff]
  %v83 = vld [vmem:[%s0 + $0x188] sm:$0xf]
  %v84 = vld [vmem:[%s0 + $0x18c] sm:$0xff]
  %v85 = vld [vmem:[%s0 + $0x194] sm:$0xf]
  %v86 = vld [vmem:[%s0 + $0x198] sm:$0xff]
  %v87 = vld [vmem:[%s0 + $0x1a0] sm:$0xf]
  %v88 = vld [vmem:[%s0 + $0x1a4] sm:$0xff]
  %v89 = vld [vmem:[%s0 + $0x1ac] sm:$0xf]
  %v90 = vld [vmem:[%s0 + $0x1b0] sm:$0xff]
  %v91 = vld [vmem:[%s0 + $0x1b8] sm:$0xf]
  %v92 = vld [vmem:[%s0 + $0x1bc] sm:$0xff]
  %v93 = vld [vmem:[%s0 + $0x1c4] sm:$0xf]
  %v94 = vld [vmem:[%s0 + $0x1c8] sm:$0xff]
  %v95 = vld [vmem:[%s0 + $0x1d0] sm:$0xf]
  %v96 = vld [vmem:[%s0 + $0x1d4] sm:$0xff]
  %v97 = vld [vmem:[%s0 + $0x1dc] sm:$0xf]
  %v98 = vld [vmem:[%s0 + $0x1e0] sm:$0xff]
  %v99 = vld [vmem:[%s0 + $0x1e8] sm:$0xf]
  %v100 = vld [vmem:[%s0 + $0x1ec] sm:$0xff]
  %v101 = vld [vmem:[%s0 + $0x1f4] sm:$0xf]
  %v102 = vld [vmem:[%s0 + $0x1f8] sm:$0xff]
  %v103 = vld [vmem:[%s0 + $0x200] sm:$0xf]
  %v104 = vld [vmem:[%s0 + $0x204] sm:$0xff]
  %v105 = vld [vmem:[%s0 + $0x20c] sm:$0xf]
  %v106 = vld [vmem:[%s0 + $0x210] sm:$0xff]
  %v107 = vld [vmem:[%s0 + $0x218] sm:$0xf]
  %v108 = vld [vmem:[%s0 + $0x21c] sm:$0xff]
  %v109 = vld [vmem:[%s0 + $0x224] sm:$0xf]
  %v110 = vld [vmem:[%s0 + $0x228] sm:$0xff]
  %v111 = vld [vmem:[%s0 + $0x230] sm:$0xf]
  %v112 = vld [vmem:[%s0 + $0x234] sm:$0xff]
  %v113 = vld [vmem:[%s0 + $0x23c] sm:$0xf]
  %v114 = vld [vmem:[%s0 + $0x240] sm:$0xff]
  %v115 = vld [vmem:[%s0 + $0x248] sm:$0xf]
  %v116 = vld [vmem:[%s0 + $0x24c] sm:$0xff]
  %v117 = vld [vmem:[%s0 + $0x254] sm:$0xf]
  %v118 = vld [vmem:[%s0 + $0x258] sm:$0xff]
  %v119 = vld [vmem:[%s0 + $0x260] sm:$0xf]
  %v120 = vld [vmem:[%s0 + $0x264] sm:$0xff]
  %v121 = vld [vmem:[%s0 + $0x26c] sm:$0xf]
  %v122 = vld [vmem:[%s0 + $0x270] sm:$0xff]
  %v123 = vld [vmem:[%s0 + $0x278] sm:$0xf]
  %v124 = vld [vmem:[%s0 + $0x27c] sm:$0xff]
  %v125 = vld [vmem:[%s0 + $0x284] sm:$0xf]
  %v126 = vld [vmem:[%s0 + $0x288] sm:$0xff]
  %v127 = vld [vmem:[%s0 + $0x290] sm:$0xf]
  %v128 = vld [vmem:[%s0 + $0x294] sm:$0xff]
  %v129 = vld [vmem:[%s0 + $0x29c] sm:$0xf]
  %v130 = vld [vmem:[%s0 + $0x2a0] sm:$0xff]
  %v131 = vld [vmem:[%s0 + $0x2a8] sm:$0xf]
  %v132 = vld [vmem:[%s0 + $0x2ac] sm:$0xff]
  %v133 = vld [vmem:[%s0 + $0x2b4] sm:$0xf]
  %v134 = vld [vmem:[%s0 + $0x2b8] sm:$0xff]
  %v135 = vld [vmem:[%s0 + $0x2c0] sm:$0xf]
  %v136 = vld [vmem:[%s0 + $0x2c4] sm:$0xff]
  %v137 = vld [vmem:[%s0 + $0x2cc] sm:$0xf]
  %v138 = vld [vmem:[%s0 + $0x2d0] sm:$0xff]
  %v139 = vld [vmem:[%s0 + $0x2d8] sm:$0xf]
  %v140 = vld [vmem:[%s0 + $0x2dc] sm:$0xff]
  %v141 = vld [vmem:[%s0 + $0x2e4] sm:$0xf]
  %v142 = vld [vmem:[%s0 + $0x2e8] sm:$0xff]
  %v143 = vld [vmem:[%s0 + $0x2f0] sm:$0xf]
  %v144 = vld [vmem:[%s0 + $0x2f4] sm:$0xff]
  %v145 = vld [vmem:[%s0 + $0x2fc] sm:$0xf]
  %v146 = vld [vmem:[%s2] sm:$0xf]
  %v147 = vld [vmem:[%s2 + $0x4] sm:$0xf]
  %v148 = vld [vmem:[%s2 + $0x8] sm:$0xf]
  %v149 = vld [vmem:[%s2 + $0xc] sm:$0xf]
  %v150 = vld [vmem:[%s2 + $0x10] sm:$0xf]
  %v151 = vld [vmem:[%s2 + $0x14] sm:$0xf]
  %v152 = vld [vmem:[%s2 + $0x18] sm:$0xf]
  %v153 = vld [vmem:[%s2 + $0x1c] sm:$0xf]
  %v154 = vld [vmem:[%s2 + $0x20] sm:$0xf]
  %v155 = vld [vmem:[%s2 + $0x24] sm:$0xf]
  %v156 = vld [vmem:[%s2 + $0x28] sm:$0xf]
  %v157 = vld [vmem:[%s2 + $0x2c] sm:$0xf]
  %v158 = vld [vmem:[%s2 + $0x30] sm:$0xf]
  %v159 = vld [vmem:[%s2 + $0x34] sm:$0xf]
  %v160 = vld [vmem:[%s2 + $0x38] sm:$0xf]
  %v161 = vld [vmem:[%s2 + $0x3c] sm:$0xf]
  %v162 = vld [vmem:[%s2 + $0x40] sm:$0xf]
  %v163 = vld [vmem:[%s2 + $0x44] sm:$0xf]
  %v164 = vld [vmem:[%s2 + $0x48] sm:$0xf]
  %v165 = vld [vmem:[%s2 + $0x4c] sm:$0xf]
  %v166 = vld [vmem:[%s2 + $0x50] sm:$0xf]
  %v167 = vld [vmem:[%s2 + $0x54] sm:$0xf]
  %v168 = vld [vmem:[%s2 + $0x58] sm:$0xf]
  %v169 = vld [vmem:[%s2 + $0x5c] sm:$0xf]
  %v170 = vld [vmem:[%s2 + $0x60] sm:$0xf]
  %v171 = vld [vmem:[%s2 + $0x64] sm:$0xf]
  %v172 = vld [vmem:[%s2 + $0x68] sm:$0xf]
  %v173 = vld [vmem:[%s2 + $0x6c] sm:$0xf]
  %v174 = vld [vmem:[%s2 + $0x70] sm:$0xf]
  %v175 = vld [vmem:[%s2 + $0x74] sm:$0xf]
  %v176 = vld [vmem:[%s2 + $0x78] sm:$0xf]
  %v177 = vld [vmem:[%s2 + $0x7c] sm:$0xf]
  %v178 = vld [vmem:[%s2 + $0x80] sm:$0xf]
  %v179 = vld [vmem:[%s2 + $0x84] sm:$0xf]
  %v180 = vld [vmem:[%s2 + $0x88] sm:$0xf]
  %v181 = vld [vmem:[%s2 + $0x8c] sm:$0xf]
  %v182 = vld [vmem:[%s2 + $0x90] sm:$0xf]
  %v183 = vld [vmem:[%s2 + $0x94] sm:$0xf]
  %v184 = vld [vmem:[%s2 + $0x98] sm:$0xf]
  %v185 = vld [vmem:[%s2 + $0x9c] sm:$0xf]
  %v186 = vld [vmem:[%s2 + $0xa0] sm:$0xf]
  %v187 = vld [vmem:[%s2 + $0xa4] sm:$0xf]
  %v188 = vld [vmem:[%s2 + $0xa8] sm:$0xf]
  %v189 = vld [vmem:[%s2 + $0xac] sm:$0xf]
  %v190 = vld [vmem:[%s2 + $0xb0] sm:$0xf]
  %v191 = vld [vmem:[%s2 + $0xb4] sm:$0xf]
  %v192 = vld [vmem:[%s2 + $0xb8] sm:$0xf]
  %v193 = vld [vmem:[%s2 + $0xbc] sm:$0xf]
  %v194 = vld [vmem:[%s3] sm:$0x1]
  %v196 = vlaneseq
  %v197 = vshrl.u32 %v196, 7
  %v198 = vsub.s32 0, %v197
  %v199 = vrot.slane %v194, %v198
  %v329 = vunpack.c.l.b16 %v18
  %v330 = vunpack.c.h.b16 %v18
  %v331 = vunpack.c.l.b16 %v19
  %v332 = vunpack.c.l.b16 %v20
  %v333 = vunpack.c.h.b16 %v20
  %v334 = vunpack.c.l.b16 %v21
  %v335 = vunpack.c.l.b16 %v22
  %v336 = vunpack.c.h.b16 %v22
  %v337 = vunpack.c.l.b16 %v23
  %v338 = vunpack.c.l.b16 %v24
  %v339 = vunpack.c.h.b16 %v24
  %v340 = vunpack.c.l.b16 %v25
  %v341 = vunpack.c.l.b16 %v26
  %v342 = vunpack.c.h.b16 %v26
  %v343 = vunpack.c.l.b16 %v27
  %v344 = vunpack.c.l.b16 %v28
  %v345 = vunpack.c.h.b16 %v28
  %v346 = vunpack.c.l.b16 %v29
  %v347 = vunpack.c.l.b16 %v30
  %v348 = vunpack.c.h.b16 %v30
  %v349 = vunpack.c.l.b16 %v31
  %v350 = vunpack.c.l.b16 %v32
  %v351 = vunpack.c.h.b16 %v32
  %v352 = vunpack.c.l.b16 %v33
  %v353 = vunpack.c.l.b16 %v34
  %v354 = vunpack.c.h.b16 %v34
  %v355 = vunpack.c.l.b16 %v35
  %v356 = vunpack.c.l.b16 %v36
  %v357 = vunpack.c.h.b16 %v36
  %v358 = vunpack.c.l.b16 %v37
  %v359 = vunpack.c.l.b16 %v38
  %v360 = vunpack.c.h.b16 %v38
  %v361 = vunpack.c.l.b16 %v39
  %v362 = vunpack.c.l.b16 %v40
  %v363 = vunpack.c.h.b16 %v40
  %v364 = vunpack.c.l.b16 %v41
  %v365 = vunpack.c.l.b16 %v42
  %v366 = vunpack.c.h.b16 %v42
  %v367 = vunpack.c.l.b16 %v43
  %v368 = vunpack.c.l.b16 %v44
  %v369 = vunpack.c.h.b16 %v44
  %v370 = vunpack.c.l.b16 %v45
  %v371 = vunpack.c.l.b16 %v46
  %v372 = vunpack.c.h.b16 %v46
  %v373 = vunpack.c.l.b16 %v47
  %v374 = vunpack.c.l.b16 %v48
  %v375 = vunpack.c.h.b16 %v48
  %v376 = vunpack.c.l.b16 %v49
  %v377 = vunpack.c.l.b16 %v50
  %v378 = vunpack.c.h.b16 %v50
  %v379 = vunpack.c.l.b16 %v51
  %v380 = vunpack.c.l.b16 %v52
  %v381 = vunpack.c.h.b16 %v52
  %v382 = vunpack.c.l.b16 %v53
  %v383 = vunpack.c.l.b16 %v54
  %v384 = vunpack.c.h.b16 %v54
  %v385 = vunpack.c.l.b16 %v55
  %v386 = vunpack.c.l.b16 %v56
  %v387 = vunpack.c.h.b16 %v56
  %v388 = vunpack.c.l.b16 %v57
  %v389 = vunpack.c.l.b16 %v58
  %v390 = vunpack.c.h.b16 %v58
  %v391 = vunpack.c.l.b16 %v59
  %v392 = vunpack.c.l.b16 %v60
  %v393 = vunpack.c.h.b16 %v60
  %v394 = vunpack.c.l.b16 %v61
  %v395 = vunpack.c.l.b16 %v62
  %v396 = vunpack.c.h.b16 %v62
  %v397 = vunpack.c.l.b16 %v63
  %v398 = vunpack.c.l.b16 %v64
  %v399 = vunpack.c.h.b16 %v64
  %v400 = vunpack.c.l.b16 %v65
  %v401 = vunpack.c.l.b16 %v66
  %v402 = vunpack.c.h.b16 %v66
  %v403 = vunpack.c.l.b16 %v67
  %v404 = vunpack.c.l.b16 %v68
  %v405 = vunpack.c.h.b16 %v68
  %v406 = vunpack.c.l.b16 %v69
  %v407 = vunpack.c.l.b16 %v70
  %v408 = vunpack.c.h.b16 %v70
  %v409 = vunpack.c.l.b16 %v71
  %v410 = vunpack.c.l.b16 %v72
  %v411 = vunpack.c.h.b16 %v72
  %v412 = vunpack.c.l.b16 %v73
  %v413 = vunpack.c.l.b16 %v74
  %v414 = vunpack.c.h.b16 %v74
  %v415 = vunpack.c.l.b16 %v75
  %v416 = vunpack.c.l.b16 %v76
  %v417 = vunpack.c.h.b16 %v76
  %v418 = vunpack.c.l.b16 %v77
  %v419 = vunpack.c.l.b16 %v78
  %v420 = vunpack.c.h.b16 %v78
  %v421 = vunpack.c.l.b16 %v79
  %v422 = vunpack.c.l.b16 %v80
  %v423 = vunpack.c.h.b16 %v80
  %v424 = vunpack.c.l.b16 %v81
  %v425 = vunpack.c.l.b16 %v82
  %v426 = vunpack.c.h.b16 %v82
  %v427 = vunpack.c.l.b16 %v83
  %v428 = vunpack.c.l.b16 %v84
  %v429 = vunpack.c.h.b16 %v84
  %v430 = vunpack.c.l.b16 %v85
  %v431 = vunpack.c.l.b16 %v86
  %v432 = vunpack.c.h.b16 %v86
  %v433 = vunpack.c.l.b16 %v87
  %v434 = vunpack.c.l.b16 %v88
  %v435 = vunpack.c.h.b16 %v88
  %v436 = vunpack.c.l.b16 %v89
  %v437 = vunpack.c.l.b16 %v90
  %v438 = vunpack.c.h.b16 %v90
  %v439 = vunpack.c.l.b16 %v91
  %v440 = vunpack.c.l.b16 %v92
  %v441 = vunpack.c.h.b16 %v92
  %v442 = vunpack.c.l.b16 %v93
  %v443 = vunpack.c.l.b16 %v94
  %v444 = vunpack.c.h.b16 %v94
  %v445 = vunpack.c.l.b16 %v95
  %v446 = vunpack.c.l.b16 %v96
  %v447 = vunpack.c.h.b16 %v96
  %v448 = vunpack.c.l.b16 %v97
  %v449 = vunpack.c.l.b16 %v98
  %v450 = vunpack.c.h.b16 %v98
  %v451 = vunpack.c.l.b16 %v99
  %v452 = vunpack.c.l.b16 %v100
  %v453 = vunpack.c.h.b16 %v100
  %v454 = vunpack.c.l.b16 %v101
  %v455 = vunpack.c.l.b16 %v102
  %v456 = vunpack.c.h.b16 %v102
  %v457 = vunpack.c.l.b16 %v103
  %v458 = vunpack.c.l.b16 %v104
  %v459 = vunpack.c.h.b16 %v104
  %v460 = vunpack.c.l.b16 %v105
  %v461 = vunpack.c.l.b16 %v106
  %v462 = vunpack.c.h.b16 %v106
  %v463 = vunpack.c.l.b16 %v107
  %v464 = vunpack.c.l.b16 %v108
  %v465 = vunpack.c.h.b16 %v108
  %v466 = vunpack.c.l.b16 %v109
  %v467 = vunpack.c.l.b16 %v110
  %v468 = vunpack.c.h.b16 %v110
  %v469 = vunpack.c.l.b16 %v111
  %v470 = vunpack.c.l.b16 %v112
  %v471 = vunpack.c.h.b16 %v112
  %v472 = vunpack.c.l.b16 %v113
  %v473 = vunpack.c.l.b16 %v114
  %v474 = vunpack.c.h.b16 %v114
  %v475 = vunpack.c.l.b16 %v115
  %v476 = vunpack.c.l.b16 %v116
  %v477 = vunpack.c.h.b16 %v116
  %v478 = vunpack.c.l.b16 %v117
  %v479 = vunpack.c.l.b16 %v118
  %v480 = vunpack.c.h.b16 %v118
  %v481 = vunpack.c.l.b16 %v119
  %v482 = vunpack.c.l.b16 %v120
  %v483 = vunpack.c.h.b16 %v120
  %v484 = vunpack.c.l.b16 %v121
  %v485 = vunpack.c.l.b16 %v122
  %v486 = vunpack.c.h.b16 %v122
  %v487 = vunpack.c.l.b16 %v123
  %v488 = vunpack.c.l.b16 %v124
  %v489 = vunpack.c.h.b16 %v124
  %v490 = vunpack.c.l.b16 %v125
  %v491 = vunpack.c.l.b16 %v126
  %v492 = vunpack.c.h.b16 %v126
  %v493 = vunpack.c.l.b16 %v127
  %v494 = vunpack.c.l.b16 %v128
  %v495 = vunpack.c.h.b16 %v128
  %v496 = vunpack.c.l.b16 %v129
  %v497 = vunpack.c.l.b16 %v130
  %v498 = vunpack.c.h.b16 %v130
  %v499 = vunpack.c.l.b16 %v131
  %v500 = vunpack.c.l.b16 %v132
  %v501 = vunpack.c.h.b16 %v132
  %v502 = vunpack.c.l.b16 %v133
  %v503 = vunpack.c.l.b16 %v134
  %v504 = vunpack.c.h.b16 %v134
  %v505 = vunpack.c.l.b16 %v135
  %v506 = vunpack.c.l.b16 %v136
  %v507 = vunpack.c.h.b16 %v136
  %v508 = vunpack.c.l.b16 %v137
  %v509 = vunpack.c.l.b16 %v138
  %v510 = vunpack.c.h.b16 %v138
  %v511 = vunpack.c.l.b16 %v139
  %v512 = vunpack.c.l.b16 %v140
  %v513 = vunpack.c.h.b16 %v140
  %v514 = vunpack.c.l.b16 %v141
  %v515 = vunpack.c.l.b16 %v142
  %v516 = vunpack.c.h.b16 %v142
  %v517 = vunpack.c.l.b16 %v143
  %v518 = vunpack.c.l.b16 %v144
  %v519 = vunpack.c.h.b16 %v144
  %v520 = vunpack.c.l.b16 %v145
  %v521 = vpack.c.b16 %v332, %v329
  %v522 = vpack.c.b16 %v333, %v330
  %v523 = vpack.c.b16 %v334, %v331
  %v524 = vpack.c.b16 %v338, %v335
  %v525 = vpack.c.b16 %v339, %v336
  %v526 = vpack.c.b16 %v340, %v337
  %v527 = vpack.c.b16 %v344, %v341
  %v528 = vpack.c.b16 %v345, %v342
  %v529 = vpack.c.b16 %v346, %v343
  %v530 = vpack.c.b16 %v350, %v347
  %v531 = vpack.c.b16 %v351, %v348
  %v532 = vpack.c.b16 %v352, %v349
  %v533 = vpack.c.b16 %v356, %v353
  %v534 = vpack.c.b16 %v357, %v354
  %v535 = vpack.c.b16 %v358, %v355
  %v536 = vpack.c.b16 %v362, %v359
  %v537 = vpack.c.b16 %v363, %v360
  %v538 = vpack.c.b16 %v364, %v361
  %v539 = vpack.c.b16 %v368, %v365
  %v540 = vpack.c.b16 %v369, %v366
  %v541 = vpack.c.b16 %v370, %v367
  %v542 = vpack.c.b16 %v374, %v371
  %v543 = vpack.c.b16 %v375, %v372
  %v544 = vpack.c.b16 %v376, %v373
  %v545 = vpack.c.b16 %v380, %v377
  %v546 = vpack.c.b16 %v381, %v378
  %v547 = vpack.c.b16 %v382, %v379
  %v548 = vpack.c.b16 %v386, %v383
  %v549 = vpack.c.b16 %v387, %v384
  %v550 = vpack.c.b16 %v388, %v385
  %v551 = vpack.c.b16 %v392, %v389
  %v552 = vpack.c.b16 %v393, %v390
  %v553 = vpack.c.b16 %v394, %v391
  %v554 = vpack.c.b16 %v398, %v395
  %v555 = vpack.c.b16 %v399, %v396
  %v556 = vpack.c.b16 %v400, %v397
  %v557 = vpack.c.b16 %v404, %v401
  %v558 = vpack.c.b16 %v405, %v402
  %v559 = vpack.c.b16 %v406, %v403
  %v560 = vpack.c.b16 %v410, %v407
  %v561 = vpack.c.b16 %v411, %v408
  %v562 = vpack.c.b16 %v412, %v409
  %v563 = vpack.c.b16 %v416, %v413
  %v564 = vpack.c.b16 %v417, %v414
  %v565 = vpack.c.b16 %v418, %v415
  %v566 = vpack.c.b16 %v422, %v419
  %v567 = vpack.c.b16 %v423, %v420
  %v568 = vpack.c.b16 %v424, %v421
  %v569 = vpack.c.b16 %v428, %v425
  %v570 = vpack.c.b16 %v429, %v426
  %v571 = vpack.c.b16 %v430, %v427
  %v572 = vpack.c.b16 %v434, %v431
  %v573 = vpack.c.b16 %v435, %v432
  %v574 = vpack.c.b16 %v436, %v433
  %v575 = vpack.c.b16 %v440, %v437
  %v576 = vpack.c.b16 %v441, %v438
  %v577 = vpack.c.b16 %v442, %v439
  %v578 = vpack.c.b16 %v446, %v443
  %v579 = vpack.c.b16 %v447, %v444
  %v580 = vpack.c.b16 %v448, %v445
  %v581 = vpack.c.b16 %v452, %v449
  %v582 = vpack.c.b16 %v453, %v450
  %v583 = vpack.c.b16 %v454, %v451
  %v584 = vpack.c.b16 %v458, %v455
  %v585 = vpack.c.b16 %v459, %v456
  %v586 = vpack.c.b16 %v460, %v457
  %v587 = vpack.c.b16 %v464, %v461
  %v588 = vpack.c.b16 %v465, %v462
  %v589 = vpack.c.b16 %v466, %v463
  %v590 = vpack.c.b16 %v470, %v467
  %v591 = vpack.c.b16 %v471, %v468
  %v592 = vpack.c.b16 %v472, %v469
  %v593 = vpack.c.b16 %v476, %v473
  %v594 = vpack.c.b16 %v477, %v474
  %v595 = vpack.c.b16 %v478, %v475
  %v596 = vpack.c.b16 %v482, %v479
  %v597 = vpack.c.b16 %v483, %v480
  %v598 = vpack.c.b16 %v484, %v481
  %v599 = vpack.c.b16 %v488, %v485
  %v600 = vpack.c.b16 %v489, %v486
  %v601 = vpack.c.b16 %v490, %v487
  %v602 = vpack.c.b16 %v494, %v491
  %v603 = vpack.c.b16 %v495, %v492
  %v604 = vpack.c.b16 %v496, %v493
  %v605 = vpack.c.b16 %v500, %v497
  %v606 = vpack.c.b16 %v501, %v498
  %v607 = vpack.c.b16 %v502, %v499
  %v608 = vpack.c.b16 %v506, %v503
  %v609 = vpack.c.b16 %v507, %v504
  %v610 = vpack.c.b16 %v508, %v505
  %v611 = vpack.c.b16 %v512, %v509
  %v612 = vpack.c.b16 %v513, %v510
  %v613 = vpack.c.b16 %v514, %v511
  %v614 = vpack.c.b16 %v518, %v515
  %v615 = vpack.c.b16 %v519, %v516
  %v616 = vpack.c.b16 %v520, %v517
  %v761 = vunpack.c.l.b16 %v146
  %v762 = vunpack.c.l.b16 %v147
  %v763 = vunpack.c.l.b16 %v148
  %v764 = vunpack.c.l.b16 %v149
  %v765 = vunpack.c.l.b16 %v150
  %v766 = vunpack.c.l.b16 %v151
  %v767 = vunpack.c.l.b16 %v152
  %v768 = vunpack.c.l.b16 %v153
  %v769 = vunpack.c.l.b16 %v154
  %v770 = vunpack.c.l.b16 %v155
  %v771 = vunpack.c.l.b16 %v156
  %v772 = vunpack.c.l.b16 %v157
  %v773 = vunpack.c.l.b16 %v158
  %v774 = vunpack.c.l.b16 %v159
  %v775 = vunpack.c.l.b16 %v160
  %v776 = vunpack.c.l.b16 %v161
  %v777 = vunpack.c.l.b16 %v162
  %v778 = vunpack.c.l.b16 %v163
  %v779 = vunpack.c.l.b16 %v164
  %v780 = vunpack.c.l.b16 %v165
  %v781 = vunpack.c.l.b16 %v166
  %v782 = vunpack.c.l.b16 %v167
  %v783 = vunpack.c.l.b16 %v168
  %v784 = vunpack.c.l.b16 %v169
  %v785 = vunpack.c.l.b16 %v170
  %v786 = vunpack.c.l.b16 %v171
  %v787 = vunpack.c.l.b16 %v172
  %v788 = vunpack.c.l.b16 %v173
  %v789 = vunpack.c.l.b16 %v174
  %v790 = vunpack.c.l.b16 %v175
  %v791 = vunpack.c.l.b16 %v176
  %v792 = vunpack.c.l.b16 %v177
  %v793 = vunpack.c.l.b16 %v178
  %v794 = vunpack.c.l.b16 %v179
  %v795 = vunpack.c.l.b16 %v180
  %v796 = vunpack.c.l.b16 %v181
  %v797 = vunpack.c.l.b16 %v182
  %v798 = vunpack.c.l.b16 %v183
  %v799 = vunpack.c.l.b16 %v184
  %v800 = vunpack.c.l.b16 %v185
  %v801 = vunpack.c.l.b16 %v186
  %v802 = vunpack.c.l.b16 %v187
  %v803 = vunpack.c.l.b16 %v188
  %v804 = vunpack.c.l.b16 %v189
  %v805 = vunpack.c.l.b16 %v190
  %v806 = vunpack.c.l.b16 %v191
  %v807 = vunpack.c.l.b16 %v192
  %v808 = vunpack.c.l.b16 %v193
  %v809 = vpack.c.b16 %v762, %v761
  %v810 = vpack.c.b16 %v764, %v763
  %v811 = vpack.c.b16 %v766, %v765
  %v812 = vpack.c.b16 %v768, %v767
  %v813 = vpack.c.b16 %v770, %v769
  %v814 = vpack.c.b16 %v772, %v771
  %v815 = vpack.c.b16 %v774, %v773
  %v816 = vpack.c.b16 %v776, %v775
  %v817 = vpack.c.b16 %v778, %v777
  %v818 = vpack.c.b16 %v780, %v779
  %v819 = vpack.c.b16 %v782, %v781
  %v820 = vpack.c.b16 %v784, %v783
  %v821 = vpack.c.b16 %v786, %v785
  %v822 = vpack.c.b16 %v788, %v787
  %v823 = vpack.c.b16 %v790, %v789
  %v824 = vpack.c.b16 %v792, %v791
  %v825 = vpack.c.b16 %v794, %v793
  %v826 = vpack.c.b16 %v796, %v795
  %v827 = vpack.c.b16 %v798, %v797
  %v828 = vpack.c.b16 %v800, %v799
  %v829 = vpack.c.b16 %v802, %v801
  %v830 = vpack.c.b16 %v804, %v803
  %v831 = vpack.c.b16 %v806, %v805
  %v832 = vpack.c.b16 %v808, %v807
  %857 = vmatprep.subr.bf16.mxu0 0
  %858 = vmatpush1.bf16.msra.mxu0 %v816
  %859 = vmatprep.subr.bf16.mxu0 0
  %860 = vmatpush1.bf16.msra.mxu0 %v815
  %861 = vmatprep.subr.bf16.mxu0 0
  %862 = vmatpush1.bf16.msra.mxu0 %v814
  %863 = vmatprep.subr.bf16.mxu0 0
  %864 = vmatpush1.bf16.msra.mxu0 %v813
  %865 = vmatprep.subr.bf16.mxu0 0
  %866 = vmatpush1.bf16.msra.mxu0 %v812
  %867 = vmatprep.subr.bf16.mxu0 0
  %868 = vmatpush1.bf16.msra.mxu0 %v811
  %869 = vmatprep.subr.bf16.mxu0 0
  %870 = vmatpush1.bf16.msra.mxu0 %v810
  %871 = vmatprep.subr.bf16.mxu0 0
  %872 = vmatpush1.bf16.msra.mxu0 %v809
  %873 = vmatprep.subr.bf16.mxu0 0
  %874 = vmatpush2.bf16.msra.mxu0 %v824
  %875 = vmatprep.subr.bf16.mxu0 0
  %876 = vmatpush2.bf16.msra.mxu0 %v823
  %877 = vmatprep.subr.bf16.mxu0 0
  %878 = vmatpush2.bf16.msra.mxu0 %v822
  %879 = vmatprep.subr.bf16.mxu0 0
  %880 = vmatpush2.bf16.msra.mxu0 %v821
  %881 = vmatprep.subr.bf16.mxu0 0
  %882 = vmatpush2.bf16.msra.mxu0 %v820
  %883 = vmatprep.subr.bf16.mxu0 0
  %884 = vmatpush2.bf16.msra.mxu0 %v819
  %885 = vmatprep.subr.bf16.mxu0 0
  %886 = vmatpush2.bf16.msra.mxu0 %v818
  %887 = vmatprep.subr.bf16.mxu0 0
  %888 = vmatpush2.bf16.msra.mxu0 %v817
  %889 = vmatprep.mubr.bf16.mxu0 %v522
  %890 = vmatmul.mubr.bf16.gmra.mxu0 %v521
  %v891 = vpop.f32.mrf.mxu0
  %v892 = vadd.f32 %v199, %v891
  %v893 = vpop.f32.mrf.mxu0
  %v894 = vpop.f32.mrf.mxu0
  %v895 = vadd.f32 %v199, %v894
  %v896 = vpop.f32.mrf.mxu0
  %897 = vmatprep.mubr.bf16.mxu0 %v525
  %898 = vmatmul.mubr.bf16.gmra.mxu0 %v524
  %v899 = vpop.f32.mrf.mxu0
  %v900 = vadd.f32 %v199, %v899
  %v901 = vpop.f32.mrf.mxu0
  %v902 = vpop.f32.mrf.mxu0
  %v903 = vadd.f32 %v199, %v902
  %v904 = vpop.f32.mrf.mxu0
  %905 = vmatprep.mubr.bf16.mxu0 %v528
  %906 = vmatmul.mubr.bf16.gmra.mxu0 %v527
  %v907 = vpop.f32.mrf.mxu0
  %v908 = vadd.f32 %v199, %v907
  %v909 = vpop.f32.mrf.mxu0
  %v910 = vpop.f32.mrf.mxu0
  %v911 = vadd.f32 %v199, %v910
  %v912 = vpop.f32.mrf.mxu0
  %913 = vmatprep.mubr.bf16.mxu0 %v531
  %914 = vmatmul.mubr.bf16.gmra.mxu0 %v530
  %v915 = vpop.f32.mrf.mxu0
  %v916 = vadd.f32 %v199, %v915
  %v917 = vpop.f32.mrf.mxu0
  %v918 = vpop.f32.mrf.mxu0
  %v919 = vadd.f32 %v199, %v918
  %v920 = vpop.f32.mrf.mxu0
  %921 = vmatprep.mubr.bf16.mxu0 %v534
  %922 = vmatmul.mubr.bf16.gmra.mxu0 %v533
  %v923 = vpop.f32.mrf.mxu0
  %v924 = vadd.f32 %v199, %v923
  %v925 = vpop.f32.mrf.mxu0
  %v926 = vpop.f32.mrf.mxu0
  %v927 = vadd.f32 %v199, %v926
  %v928 = vpop.f32.mrf.mxu0
  %929 = vmatprep.mubr.bf16.mxu0 %v537
  %930 = vmatmul.mubr.bf16.gmra.mxu0 %v536
  %v931 = vpop.f32.mrf.mxu0
  %v932 = vadd.f32 %v199, %v931
  %v933 = vpop.f32.mrf.mxu0
  %v934 = vpop.f32.mrf.mxu0
  %v935 = vadd.f32 %v199, %v934
  %v936 = vpop.f32.mrf.mxu0
  %937 = vmatprep.mubr.bf16.mxu0 %v540
  %938 = vmatmul.mubr.bf16.gmra.mxu0 %v539
  %v939 = vpop.f32.mrf.mxu0
  %v940 = vadd.f32 %v199, %v939
  %v941 = vpop.f32.mrf.mxu0
  %v942 = vpop.f32.mrf.mxu0
  %v943 = vadd.f32 %v199, %v942
  %v944 = vpop.f32.mrf.mxu0
  %945 = vmatprep.mubr.bf16.mxu0 %v543
  %946 = vmatmul.mubr.bf16.gmra.mxu0 %v542
  %v947 = vpop.f32.mrf.mxu0
  %v948 = vadd.f32 %v199, %v947
  %v949 = vpop.f32.mrf.mxu0
  %v950 = vpop.f32.mrf.mxu0
  %v951 = vadd.f32 %v199, %v950
  %v952 = vpop.f32.mrf.mxu0
  %953 = vmatprep.mubr.bf16.mxu0 %v546
  %954 = vmatmul.mubr.bf16.gmra.mxu0 %v545
  %v955 = vpop.f32.mrf.mxu0
  %v956 = vadd.f32 %v199, %v955
  %v957 = vpop.f32.mrf.mxu0
  %v958 = vpop.f32.mrf.mxu0
  %v959 = vadd.f32 %v199, %v958
  %v960 = vpop.f32.mrf.mxu0
  %961 = vmatprep.mubr.bf16.mxu0 %v549
  %962 = vmatmul.mubr.bf16.gmra.mxu0 %v548
  %v963 = vpop.f32.mrf.mxu0
  %v964 = vadd.f32 %v199, %v963
  %v965 = vpop.f32.mrf.mxu0
  %v966 = vpop.f32.mrf.mxu0
  %v967 = vadd.f32 %v199, %v966
  %v968 = vpop.f32.mrf.mxu0
  %969 = vmatprep.mubr.bf16.mxu0 %v552
  %970 = vmatmul.mubr.bf16.gmra.mxu0 %v551
  %v971 = vpop.f32.mrf.mxu0
  %v972 = vadd.f32 %v199, %v971
  %v973 = vpop.f32.mrf.mxu0
  %v974 = vpop.f32.mrf.mxu0
  %v975 = vadd.f32 %v199, %v974
  %v976 = vpop.f32.mrf.mxu0
  %977 = vmatprep.mubr.bf16.mxu0 %v555
  %978 = vmatmul.mubr.bf16.gmra.mxu0 %v554
  %v979 = vpop.f32.mrf.mxu0
  %v980 = vadd.f32 %v199, %v979
  %v981 = vpop.f32.mrf.mxu0
  %v982 = vpop.f32.mrf.mxu0
  %v983 = vadd.f32 %v199, %v982
  %v984 = vpop.f32.mrf.mxu0
  %985 = vmatprep.mubr.bf16.mxu0 %v558
  %986 = vmatmul.mubr.bf16.gmra.mxu0 %v557
  %v987 = vpop.f32.mrf.mxu0
  %v988 = vadd.f32 %v199, %v987
  %v989 = vpop.f32.mrf.mxu0
  %v990 = vpop.f32.mrf.mxu0
  %v991 = vadd.f32 %v199, %v990
  %v992 = vpop.f32.mrf.mxu0
  %993 = vmatprep.mubr.bf16.mxu0 %v561
  %994 = vmatmul.mubr.bf16.gmra.mxu0 %v560
  %v995 = vpop.f32.mrf.mxu0
  %v996 = vadd.f32 %v199, %v995
  %v997 = vpop.f32.mrf.mxu0
  %v998 = vpop.f32.mrf.mxu0
  %v999 = vadd.f32 %v199, %v998
  %v1000 = vpop.f32.mrf.mxu0
  %1001 = vmatprep.mubr.bf16.mxu0 %v564
  %1002 = vmatmul.mubr.bf16.gmra.mxu0 %v563
  %v1003 = vpop.f32.mrf.mxu0
  %v1004 = vadd.f32 %v199, %v1003
  %v1005 = vpop.f32.mrf.mxu0
  %v1006 = vpop.f32.mrf.mxu0
  %v1007 = vadd.f32 %v199, %v1006
  %v1008 = vpop.f32.mrf.mxu0
  %1009 = vmatprep.mubr.bf16.mxu0 %v567
  %1010 = vmatmul.mubr.bf16.gmra.mxu0 %v566
  %v1011 = vpop.f32.mrf.mxu0
  %v1012 = vadd.f32 %v199, %v1011
  %v1013 = vpop.f32.mrf.mxu0
  %v1014 = vpop.f32.mrf.mxu0
  %v1015 = vadd.f32 %v199, %v1014
  %v1016 = vpop.f32.mrf.mxu0
  %1017 = vmatprep.mubr.bf16.mxu0 %v570
  %1018 = vmatmul.mubr.bf16.gmra.mxu0 %v569
  %v1019 = vpop.f32.mrf.mxu0
  %v1020 = vadd.f32 %v199, %v1019
  %v1021 = vpop.f32.mrf.mxu0
  %v1022 = vpop.f32.mrf.mxu0
  %v1023 = vadd.f32 %v199, %v1022
  %v1024 = vpop.f32.mrf.mxu0
  %1025 = vmatprep.mubr.bf16.mxu0 %v573
  %1026 = vmatmul.mubr.bf16.gmra.mxu0 %v572
  %v1027 = vpop.f32.mrf.mxu0
  %v1028 = vadd.f32 %v199, %v1027
  %v1029 = vpop.f32.mrf.mxu0
  %v1030 = vpop.f32.mrf.mxu0
  %v1031 = vadd.f32 %v199, %v1030
  %v1032 = vpop.f32.mrf.mxu0
  %1033 = vmatprep.mubr.bf16.mxu0 %v576
  %1034 = vmatmul.mubr.bf16.gmra.mxu0 %v575
  %v1035 = vpop.f32.mrf.mxu0
  %v1036 = vadd.f32 %v199, %v1035
  %v1037 = vpop.f32.mrf.mxu0
  %v1038 = vpop.f32.mrf.mxu0
  %v1039 = vadd.f32 %v199, %v1038
  %v1040 = vpop.f32.mrf.mxu0
  %1041 = vmatprep.mubr.bf16.mxu0 %v579
  %1042 = vmatmul.mubr.bf16.gmra.mxu0 %v578
  %v1043 = vpop.f32.mrf.mxu0
  %v1044 = vadd.f32 %v199, %v1043
  %v1045 = vpop.f32.mrf.mxu0
  %v1046 = vpop.f32.mrf.mxu0
  %v1047 = vadd.f32 %v199, %v1046
  %v1048 = vpop.f32.mrf.mxu0
  %1049 = vmatprep.mubr.bf16.mxu0 %v582
  %1050 = vmatmul.mubr.bf16.gmra.mxu0 %v581
  %v1051 = vpop.f32.mrf.mxu0
  %v1052 = vadd.f32 %v199, %v1051
  %v1053 = vpop.f32.mrf.mxu0
  %v1054 = vpop.f32.mrf.mxu0
  %v1055 = vadd.f32 %v199, %v1054
  %v1056 = vpop.f32.mrf.mxu0
  %1057 = vmatprep.mubr.bf16.mxu0 %v585
  %1058 = vmatmul.mubr.bf16.gmra.mxu0 %v584
  %v1059 = vpop.f32.mrf.mxu0
  %v1060 = vadd.f32 %v199, %v1059
  %v1061 = vpop.f32.mrf.mxu0
  %v1062 = vpop.f32.mrf.mxu0
  %v1063 = vadd.f32 %v199, %v1062
  %v1064 = vpop.f32.mrf.mxu0
  %1065 = vmatprep.mubr.bf16.mxu0 %v588
  %1066 = vmatmul.mubr.bf16.gmra.mxu0 %v587
  %v1067 = vpop.f32.mrf.mxu0
  %v1068 = vadd.f32 %v199, %v1067
  %v1069 = vpop.f32.mrf.mxu0
  %v1070 = vpop.f32.mrf.mxu0
  %v1071 = vadd.f32 %v199, %v1070
  %v1072 = vpop.f32.mrf.mxu0
  %1073 = vmatprep.mubr.bf16.mxu0 %v591
  %1074 = vmatmul.mubr.bf16.gmra.mxu0 %v590
  %v1075 = vpop.f32.mrf.mxu0
  %v1076 = vadd.f32 %v199, %v1075
  %v1077 = vpop.f32.mrf.mxu0
  %v1078 = vpop.f32.mrf.mxu0
  %v1079 = vadd.f32 %v199, %v1078
  %v1080 = vpop.f32.mrf.mxu0
  %1081 = vmatprep.mubr.bf16.mxu0 %v594
  %1082 = vmatmul.mubr.bf16.gmra.mxu0 %v593
  %v1083 = vpop.f32.mrf.mxu0
  %v1084 = vadd.f32 %v199, %v1083
  %v1085 = vpop.f32.mrf.mxu0
  %v1086 = vpop.f32.mrf.mxu0
  %v1087 = vadd.f32 %v199, %v1086
  %v1088 = vpop.f32.mrf.mxu0
  %1089 = vmatprep.mubr.bf16.mxu0 %v597
  %1090 = vmatmul.mubr.bf16.gmra.mxu0 %v596
  %v1091 = vpop.f32.mrf.mxu0
  %v1092 = vadd.f32 %v199, %v1091
  %v1093 = vpop.f32.mrf.mxu0
  %v1094 = vpop.f32.mrf.mxu0
  %v1095 = vadd.f32 %v199, %v1094
  %v1096 = vpop.f32.mrf.mxu0
  %1097 = vmatprep.mubr.bf16.mxu0 %v600
  %1098 = vmatmul.mubr.bf16.gmra.mxu0 %v599
  %v1099 = vpop.f32.mrf.mxu0
  %v1100 = vadd.f32 %v199, %v1099
  %v1101 = vpop.f32.mrf.mxu0
  %v1102 = vpop.f32.mrf.mxu0
  %v1103 = vadd.f32 %v199, %v1102
  %v1104 = vpop.f32.mrf.mxu0
  %1105 = vmatprep.mubr.bf16.mxu0 %v603
  %1106 = vmatmul.mubr.bf16.gmra.mxu0 %v602
  %v1107 = vpop.f32.mrf.mxu0
  %v1108 = vadd.f32 %v199, %v1107
  %v1109 = vpop.f32.mrf.mxu0
  %v1110 = vpop.f32.mrf.mxu0
  %v1111 = vadd.f32 %v199, %v1110
  %v1112 = vpop.f32.mrf.mxu0
  %1113 = vmatprep.mubr.bf16.mxu0 %v606
  %1114 = vmatmul.mubr.bf16.gmra.mxu0 %v605
  %v1115 = vpop.f32.mrf.mxu0
  %v1116 = vadd.f32 %v199, %v1115
  %v1117 = vpop.f32.mrf.mxu0
  %v1118 = vpop.f32.mrf.mxu0
  %v1119 = vadd.f32 %v199, %v1118
  %v1120 = vpop.f32.mrf.mxu0
  %1121 = vmatprep.mubr.bf16.mxu0 %v609
  %1122 = vmatmul.mubr.bf16.gmra.mxu0 %v608
  %v1123 = vpop.f32.mrf.mxu0
  %v1124 = vadd.f32 %v199, %v1123
  %v1125 = vpop.f32.mrf.mxu0
  %v1126 = vpop.f32.mrf.mxu0
  %v1127 = vadd.f32 %v199, %v1126
  %v1128 = vpop.f32.mrf.mxu0
  %1129 = vmatprep.mubr.bf16.mxu0 %v612
  %1130 = vmatmul.mubr.bf16.gmra.mxu0 %v611
  %v1131 = vpop.f32.mrf.mxu0
  %v1132 = vadd.f32 %v199, %v1131
  %v1133 = vpop.f32.mrf.mxu0
  %v1134 = vpop.f32.mrf.mxu0
  %v1135 = vadd.f32 %v199, %v1134
  %v1136 = vpop.f32.mrf.mxu0
  %1137 = vmatprep.mubr.bf16.mxu0 %v615
  %1138 = vmatmul.mubr.bf16.gmra.mxu0 %v614
  %v1139 = vpop.f32.mrf.mxu0
  %v1140 = vadd.f32 %v199, %v1139
  %v1141 = vpop.f32.mrf.mxu0
  %v1142 = vpop.f32.mrf.mxu0
  %v1143 = vadd.f32 %v199, %v1142
  %v1144 = vpop.f32.mrf.mxu0
  %1145 = vdwg.mxu0
  %1146 = vmatprep.subr.bf16.mxu0 0
  %1147 = vmatpush1.bf16.msra.mxu0 %v832
  %1148 = vmatprep.subr.bf16.mxu0 0
  %1149 = vmatpush1.bf16.msra.mxu0 %v831
  %1150 = vmatprep.subr.bf16.mxu0 0
  %1151 = vmatpush1.bf16.msra.mxu0 %v830
  %1152 = vmatprep.subr.bf16.mxu0 0
  %1153 = vmatpush1.bf16.msra.mxu0 %v829
  %1154 = vmatprep.subr.bf16.mxu0 0
  %1155 = vmatpush1.bf16.msra.mxu0 %v828
  %1156 = vmatprep.subr.bf16.mxu0 0
  %1157 = vmatpush1.bf16.msra.mxu0 %v827
  %1158 = vmatprep.subr.bf16.mxu0 0
  %1159 = vmatpush1.bf16.msra.mxu0 %v826
  %1160 = vmatprep.subr.bf16.mxu0 0
  %1161 = vmatpush1.bf16.msra.mxu0 %v825
  %1162 = vmatprep.subr.bf16.mxu0 0
  %1163 = vmatpush2.bf16.msra.mxu0 0
  %1164 = vmatprep.subr.bf16.mxu0 0
  %1165 = vmatpush2.bf16.msra.mxu0 0
  %1166 = vmatprep.subr.bf16.mxu0 0
  %1167 = vmatpush2.bf16.msra.mxu0 0
  %1168 = vmatprep.subr.bf16.mxu0 0
  %1169 = vmatpush2.bf16.msra.mxu0 0
  %1170 = vmatprep.subr.bf16.mxu0 0
  %1171 = vmatpush2.bf16.msra.mxu0 0
  %1172 = vmatprep.subr.bf16.mxu0 0
  %1173 = vmatpush2.bf16.msra.mxu0 0
  %1174 = vmatprep.subr.bf16.mxu0 0
  %1175 = vmatpush2.bf16.msra.mxu0 0
  %1176 = vmatprep.subr.bf16.mxu0 0
  %1177 = vmatpush2.bf16.msra.mxu0 0
  %1178 = vmatprep.mubr.bf16.mxu0 0
  %1179 = vmatmul.mubr.bf16.gmra.mxu0 %v523
  %v1180 = vpop.f32.mrf.mxu0
  %v1181 = vadd.f32 %v892, %v1180
  %v1182 = vpop.f32.mrf.mxu0
  %v1183 = vpop.f32.mrf.mxu0
  %v1184 = vadd.f32 %v895, %v1183
  %v1185 = vpop.f32.mrf.mxu0
  %1186 = vmatprep.mubr.bf16.mxu0 0
  %1187 = vmatmul.mubr.bf16.gmra.mxu0 %v526
  %v1188 = vpop.f32.mrf.mxu0
  %v1189 = vadd.f32 %v900, %v1188
  %v1190 = vpop.f32.mrf.mxu0
  %v1191 = vpop.f32.mrf.mxu0
  %v1192 = vadd.f32 %v903, %v1191
  %v1193 = vpop.f32.mrf.mxu0
  %1194 = vmatprep.mubr.bf16.mxu0 0
  %1195 = vmatmul.mubr.bf16.gmra.mxu0 %v529
  %v1196 = vpop.f32.mrf.mxu0
  %v1197 = vadd.f32 %v908, %v1196
  %v1198 = vpop.f32.mrf.mxu0
  %v1199 = vpop.f32.mrf.mxu0
  %v1200 = vadd.f32 %v911, %v1199
  %v1201 = vpop.f32.mrf.mxu0
  %1202 = vmatprep.mubr.bf16.mxu0 0
  %1203 = vmatmul.mubr.bf16.gmra.mxu0 %v532
  %v1204 = vpop.f32.mrf.mxu0
  %v1205 = vadd.f32 %v916, %v1204
  %v1206 = vpop.f32.mrf.mxu0
  %v1207 = vpop.f32.mrf.mxu0
  %v1208 = vadd.f32 %v919, %v1207
  %v1209 = vpop.f32.mrf.mxu0
  %1210 = vmatprep.mubr.bf16.mxu0 0
  %1211 = vmatmul.mubr.bf16.gmra.mxu0 %v535
  %v1212 = vpop.f32.mrf.mxu0
  %v1213 = vadd.f32 %v924, %v1212
  %v1214 = vpop.f32.mrf.mxu0
  %v1215 = vpop.f32.mrf.mxu0
  %v1216 = vadd.f32 %v927, %v1215
  %v1217 = vpop.f32.mrf.mxu0
  %1218 = vmatprep.mubr.bf16.mxu0 0
  %1219 = vmatmul.mubr.bf16.gmra.mxu0 %v538
  %v1220 = vpop.f32.mrf.mxu0
  %v1221 = vadd.f32 %v932, %v1220
  %v1222 = vpop.f32.mrf.mxu0
  %v1223 = vpop.f32.mrf.mxu0
  %v1224 = vadd.f32 %v935, %v1223
  %v1225 = vpop.f32.mrf.mxu0
  %1226 = vmatprep.mubr.bf16.mxu0 0
  %1227 = vmatmul.mubr.bf16.gmra.mxu0 %v541
  %v1228 = vpop.f32.mrf.mxu0
  %v1229 = vadd.f32 %v940, %v1228
  %v1230 = vpop.f32.mrf.mxu0
  %v1231 = vpop.f32.mrf.mxu0
  %v1232 = vadd.f32 %v943, %v1231
  %v1233 = vpop.f32.mrf.mxu0
  %1234 = vmatprep.mubr.bf16.mxu0 0
  %1235 = vmatmul.mubr.bf16.gmra.mxu0 %v544
  %v1236 = vpop.f32.mrf.mxu0
  %v1237 = vadd.f32 %v948, %v1236
  %v1238 = vpop.f32.mrf.mxu0
  %v1239 = vpop.f32.mrf.mxu0
  %v1240 = vadd.f32 %v951, %v1239
  %v1241 = vpop.f32.mrf.mxu0
  %1242 = vmatprep.mubr.bf16.mxu0 0
  %1243 = vmatmul.mubr.bf16.gmra.mxu0 %v547
  %v1244 = vpop.f32.mrf.mxu0
  %v1245 = vadd.f32 %v956, %v1244
  %v1246 = vpop.f32.mrf.mxu0
  %v1247 = vpop.f32.mrf.mxu0
  %v1248 = vadd.f32 %v959, %v1247
  %v1249 = vpop.f32.mrf.mxu0
  %1250 = vmatprep.mubr.bf16.mxu0 0
  %1251 = vmatmul.mubr.bf16.gmra.mxu0 %v550
  %v1252 = vpop.f32.mrf.mxu0
  %v1253 = vadd.f32 %v964, %v1252
  %v1254 = vpop.f32.mrf.mxu0
  %v1255 = vpop.f32.mrf.mxu0
  %v1256 = vadd.f32 %v967, %v1255
  %v1257 = vpop.f32.mrf.mxu0
  %1258 = vmatprep.mubr.bf16.mxu0 0
  %1259 = vmatmul.mubr.bf16.gmra.mxu0 %v553
  %v1260 = vpop.f32.mrf.mxu0
  %v1261 = vadd.f32 %v972, %v1260
  %v1262 = vpop.f32.mrf.mxu0
  %v1263 = vpop.f32.mrf.mxu0
  %v1264 = vadd.f32 %v975, %v1263
  %v1265 = vpop.f32.mrf.mxu0
  %1266 = vmatprep.mubr.bf16.mxu0 0
  %1267 = vmatmul.mubr.bf16.gmra.mxu0 %v556
  %v1268 = vpop.f32.mrf.mxu0
  %v1269 = vadd.f32 %v980, %v1268
  %v1270 = vpop.f32.mrf.mxu0
  %v1271 = vpop.f32.mrf.mxu0
  %v1272 = vadd.f32 %v983, %v1271
  %v1273 = vpop.f32.mrf.mxu0
  %1274 = vmatprep.mubr.bf16.mxu0 0
  %1275 = vmatmul.mubr.bf16.gmra.mxu0 %v559
  %v1276 = vpop.f32.mrf.mxu0
  %v1277 = vadd.f32 %v988, %v1276
  %v1278 = vpop.f32.mrf.mxu0
  %v1279 = vpop.f32.mrf.mxu0
  %v1280 = vadd.f32 %v991, %v1279
  %v1281 = vpop.f32.mrf.mxu0
  %1282 = vmatprep.mubr.bf16.mxu0 0
  %1283 = vmatmul.mubr.bf16.gmra.mxu0 %v562
  %v1284 = vpop.f32.mrf.mxu0
  %v1285 = vadd.f32 %v996, %v1284
  %v1286 = vpop.f32.mrf.mxu0
  %v1287 = vpop.f32.mrf.mxu0
  %v1288 = vadd.f32 %v999, %v1287
  %v1289 = vpop.f32.mrf.mxu0
  %1290 = vmatprep.mubr.bf16.mxu0 0
  %1291 = vmatmul.mubr.bf16.gmra.mxu0 %v565
  %v1292 = vpop.f32.mrf.mxu0
  %v1293 = vadd.f32 %v1004, %v1292
  %v1294 = vpop.f32.mrf.mxu0
  %v1295 = vpop.f32.mrf.mxu0
  %v1296 = vadd.f32 %v1007, %v1295
  %v1297 = vpop.f32.mrf.mxu0
  %1298 = vmatprep.mubr.bf16.mxu0 0
  %1299 = vmatmul.mubr.bf16.gmra.mxu0 %v568
  %v1300 = vpop.f32.mrf.mxu0
  %v1301 = vadd.f32 %v1012, %v1300
  %v1302 = vpop.f32.mrf.mxu0
  %v1303 = vpop.f32.mrf.mxu0
  %v1304 = vadd.f32 %v1015, %v1303
  %v1305 = vpop.f32.mrf.mxu0
  %1306 = vmatprep.mubr.bf16.mxu0 0
  %1307 = vmatmul.mubr.bf16.gmra.mxu0 %v571
  %v1308 = vpop.f32.mrf.mxu0
  %v1309 = vadd.f32 %v1020, %v1308
  %v1310 = vpop.f32.mrf.mxu0
  %v1311 = vpop.f32.mrf.mxu0
  %v1312 = vadd.f32 %v1023, %v1311
  %v1313 = vpop.f32.mrf.mxu0
  %1314 = vmatprep.mubr.bf16.mxu0 0
  %1315 = vmatmul.mubr.bf16.gmra.mxu0 %v574
  %v1316 = vpop.f32.mrf.mxu0
  %v1317 = vadd.f32 %v1028, %v1316
  %v1318 = vpop.f32.mrf.mxu0
  %v1319 = vpop.f32.mrf.mxu0
  %v1320 = vadd.f32 %v1031, %v1319
  %v1321 = vpop.f32.mrf.mxu0
  %1322 = vmatprep.mubr.bf16.mxu0 0
  %1323 = vmatmul.mubr.bf16.gmra.mxu0 %v577
  %v1324 = vpop.f32.mrf.mxu0
  %v1325 = vadd.f32 %v1036, %v1324
  %v1326 = vpop.f32.mrf.mxu0
  %v1327 = vpop.f32.mrf.mxu0
  %v1328 = vadd.f32 %v1039, %v1327
  %v1329 = vpop.f32.mrf.mxu0
  %1330 = vmatprep.mubr.bf16.mxu0 0
  %1331 = vmatmul.mubr.bf16.gmra.mxu0 %v580
  %v1332 = vpop.f32.mrf.mxu0
  %v1333 = vadd.f32 %v1044, %v1332
  %v1334 = vpop.f32.mrf.mxu0
  %v1335 = vpop.f32.mrf.mxu0
  %v1336 = vadd.f32 %v1047, %v1335
  %v1337 = vpop.f32.mrf.mxu0
  %1338 = vmatprep.mubr.bf16.mxu0 0
  %1339 = vmatmul.mubr.bf16.gmra.mxu0 %v583
  %v1340 = vpop.f32.mrf.mxu0
  %v1341 = vadd.f32 %v1052, %v1340
  %v1342 = vpop.f32.mrf.mxu0
  %v1343 = vpop.f32.mrf.mxu0
  %v1344 = vadd.f32 %v1055, %v1343
  %v1345 = vpop.f32.mrf.mxu0
  %1346 = vmatprep.mubr.bf16.mxu0 0
  %1347 = vmatmul.mubr.bf16.gmra.mxu0 %v586
  %v1348 = vpop.f32.mrf.mxu0
  %v1349 = vadd.f32 %v1060, %v1348
  %v1350 = vpop.f32.mrf.mxu0
  %v1351 = vpop.f32.mrf.mxu0
  %v1352 = vadd.f32 %v1063, %v1351
  %v1353 = vpop.f32.mrf.mxu0
  %1354 = vmatprep.mubr.bf16.mxu0 0
  %1355 = vmatmul.mubr.bf16.gmra.mxu0 %v589
  %v1356 = vpop.f32.mrf.mxu0
  %v1357 = vadd.f32 %v1068, %v1356
  %v1358 = vpop.f32.mrf.mxu0
  %v1359 = vpop.f32.mrf.mxu0
  %v1360 = vadd.f32 %v1071, %v1359
  %v1361 = vpop.f32.mrf.mxu0
  %1362 = vmatprep.mubr.bf16.mxu0 0
  %1363 = vmatmul.mubr.bf16.gmra.mxu0 %v592
  %v1364 = vpop.f32.mrf.mxu0
  %v1365 = vadd.f32 %v1076, %v1364
  %v1366 = vpop.f32.mrf.mxu0
  %v1367 = vpop.f32.mrf.mxu0
  %v1368 = vadd.f32 %v1079, %v1367
  %v1369 = vpop.f32.mrf.mxu0
  %1370 = vmatprep.mubr.bf16.mxu0 0
  %1371 = vmatmul.mubr.bf16.gmra.mxu0 %v595
  %v1372 = vpop.f32.mrf.mxu0
  %v1373 = vadd.f32 %v1084, %v1372
  %v1374 = vpop.f32.mrf.mxu0
  %v1375 = vpop.f32.mrf.mxu0
  %v1376 = vadd.f32 %v1087, %v1375
  %v1377 = vpop.f32.mrf.mxu0
  %1378 = vmatprep.mubr.bf16.mxu0 0
  %1379 = vmatmul.mubr.bf16.gmra.mxu0 %v598
  %v1380 = vpop.f32.mrf.mxu0
  %v1381 = vadd.f32 %v1092, %v1380
  %v1382 = vpop.f32.mrf.mxu0
  %v1383 = vpop.f32.mrf.mxu0
  %v1384 = vadd.f32 %v1095, %v1383
  %v1385 = vpop.f32.mrf.mxu0
  %1386 = vmatprep.mubr.bf16.mxu0 0
  %1387 = vmatmul.mubr.bf16.gmra.mxu0 %v601
  %v1388 = vpop.f32.mrf.mxu0
  %v1389 = vadd.f32 %v1100, %v1388
  %v1390 = vpop.f32.mrf.mxu0
  %v1391 = vpop.f32.mrf.mxu0
  %v1392 = vadd.f32 %v1103, %v1391
  %v1393 = vpop.f32.mrf.mxu0
  %1394 = vmatprep.mubr.bf16.mxu0 0
  %1395 = vmatmul.mubr.bf16.gmra.mxu0 %v604
  %v1396 = vpop.f32.mrf.mxu0
  %v1397 = vadd.f32 %v1108, %v1396
  %v1398 = vpop.f32.mrf.mxu0
  %v1399 = vpop.f32.mrf.mxu0
  %v1400 = vadd.f32 %v1111, %v1399
  %v1401 = vpop.f32.mrf.mxu0
  %1402 = vmatprep.mubr.bf16.mxu0 0
  %1403 = vmatmul.mubr.bf16.gmra.mxu0 %v607
  %v1404 = vpop.f32.mrf.mxu0
  %v1405 = vadd.f32 %v1116, %v1404
  %v1406 = vpop.f32.mrf.mxu0
  %v1407 = vpop.f32.mrf.mxu0
  %v1408 = vadd.f32 %v1119, %v1407
  %v1409 = vpop.f32.mrf.mxu0
  %1410 = vmatprep.mubr.bf16.mxu0 0
  %1411 = vmatmul.mubr.bf16.gmra.mxu0 %v610
  %v1412 = vpop.f32.mrf.mxu0
  %v1413 = vadd.f32 %v1124, %v1412
  %v1414 = vpop.f32.mrf.mxu0
  %v1415 = vpop.f32.mrf.mxu0
  %v1416 = vadd.f32 %v1127, %v1415
  %v1417 = vpop.f32.mrf.mxu0
  %1418 = vmatprep.mubr.bf16.mxu0 0
  %1419 = vmatmul.mubr.bf16.gmra.mxu0 %v613
  %v1420 = vpop.f32.mrf.mxu0
  %v1421 = vadd.f32 %v1132, %v1420
  %v1422 = vpop.f32.mrf.mxu0
  %v1423 = vpop.f32.mrf.mxu0
  %v1424 = vadd.f32 %v1135, %v1423
  %v1425 = vpop.f32.mrf.mxu0
  %1426 = vmatprep.mubr.bf16.mxu0 0
  %1427 = vmatmul.mubr.bf16.gmra.mxu0 %v616
  %v1428 = vpop.f32.mrf.mxu0
  %v1429 = vadd.f32 %v1140, %v1428
  %v1430 = vpop.f32.mrf.mxu0
  %v1431 = vpop.f32.mrf.mxu0
  %v1432 = vadd.f32 %v1143, %v1431
  %v1433 = vpop.f32.mrf.mxu0
  %1434 = vdwg.mxu0
  %v1435 = vlaneseq
  %v1436 = vand.u32 %v1435, 127
  %vm1437 = vcmp.lt.s32.totalorder %v1436, 96
  %v1438 = vsel %vm1437, 0.5, 1.0
  %v1439 = vsel %vm1437, 0.5, 0.0
  %v1440 = vmul.f32 %v1181, %v1438
  %v1441 = vmul.f32 %v1184, %v1438
  %v1442 = vmul.f32 %v1189, %v1438
  %v1443 = vmul.f32 %v1192, %v1438
  %v1444 = vmul.f32 %v1197, %v1438
  %v1445 = vmul.f32 %v1200, %v1438
  %v1446 = vmul.f32 %v1205, %v1438
  %v1447 = vmul.f32 %v1208, %v1438
  %v1448 = vmul.f32 %v1213, %v1438
  %v1449 = vmul.f32 %v1216, %v1438
  %v1450 = vmul.f32 %v1221, %v1438
  %v1451 = vmul.f32 %v1224, %v1438
  %v1452 = vmul.f32 %v1229, %v1438
  %v1453 = vmul.f32 %v1232, %v1438
  %v1454 = vmul.f32 %v1237, %v1438
  %v1455 = vmul.f32 %v1240, %v1438
  %v1456 = vmul.f32 %v1245, %v1438
  %v1457 = vmul.f32 %v1248, %v1438
  %v1458 = vmul.f32 %v1253, %v1438
  %v1459 = vmul.f32 %v1256, %v1438
  %v1460 = vmul.f32 %v1261, %v1438
  %v1461 = vmul.f32 %v1264, %v1438
  %v1462 = vmul.f32 %v1269, %v1438
  %v1463 = vmul.f32 %v1272, %v1438
  %v1464 = vmul.f32 %v1277, %v1438
  %v1465 = vmul.f32 %v1280, %v1438
  %v1466 = vmul.f32 %v1285, %v1438
  %v1467 = vmul.f32 %v1288, %v1438
  %v1468 = vmul.f32 %v1293, %v1438
  %v1469 = vmul.f32 %v1296, %v1438
  %v1470 = vmul.f32 %v1301, %v1438
  %v1471 = vmul.f32 %v1304, %v1438
  %v1472 = vmul.f32 %v1309, %v1438
  %v1473 = vmul.f32 %v1312, %v1438
  %v1474 = vmul.f32 %v1317, %v1438
  %v1475 = vmul.f32 %v1320, %v1438
  %v1476 = vmul.f32 %v1325, %v1438
  %v1477 = vmul.f32 %v1328, %v1438
  %v1478 = vmul.f32 %v1333, %v1438
  %v1479 = vmul.f32 %v1336, %v1438
  %v1480 = vmul.f32 %v1341, %v1438
  %v1481 = vmul.f32 %v1344, %v1438
  %v1482 = vmul.f32 %v1349, %v1438
  %v1483 = vmul.f32 %v1352, %v1438
  %v1484 = vmul.f32 %v1357, %v1438
  %v1485 = vmul.f32 %v1360, %v1438
  %v1486 = vmul.f32 %v1365, %v1438
  %v1487 = vmul.f32 %v1368, %v1438
  %v1488 = vmul.f32 %v1373, %v1438
  %v1489 = vmul.f32 %v1376, %v1438
  %v1490 = vmul.f32 %v1381, %v1438
  %v1491 = vmul.f32 %v1384, %v1438
  %v1492 = vmul.f32 %v1389, %v1438
  %v1493 = vmul.f32 %v1392, %v1438
  %v1494 = vmul.f32 %v1397, %v1438
  %v1495 = vmul.f32 %v1400, %v1438
  %v1496 = vmul.f32 %v1405, %v1438
  %v1497 = vmul.f32 %v1408, %v1438
  %v1498 = vmul.f32 %v1413, %v1438
  %v1499 = vmul.f32 %v1416, %v1438
  %v1500 = vmul.f32 %v1421, %v1438
  %v1501 = vmul.f32 %v1424, %v1438
  %v1502 = vmul.f32 %v1429, %v1438
  %v1503 = vmul.f32 %v1432, %v1438
  %v1504 = vtanh.pop %v1440
  %v1505 = vtanh.pop %v1441
  %v1506 = vtanh.pop %v1442
  %v1507 = vtanh.pop %v1443
  %v1508 = vtanh.pop %v1444
  %v1509 = vtanh.pop %v1445
  %v1510 = vtanh.pop %v1446
  %v1511 = vtanh.pop %v1447
  %v1512 = vtanh.pop %v1448
  %v1513 = vtanh.pop %v1449
  %v1514 = vtanh.pop %v1450
  %v1515 = vtanh.pop %v1451
  %v1516 = vtanh.pop %v1452
  %v1517 = vtanh.pop %v1453
  %v1518 = vtanh.pop %v1454
  %v1519 = vtanh.pop %v1455
  %v1520 = vtanh.pop %v1456
  %v1521 = vtanh.pop %v1457
  %v1522 = vtanh.pop %v1458
  %v1523 = vtanh.pop %v1459
  %v1524 = vtanh.pop %v1460
  %v1525 = vtanh.pop %v1461
  %v1526 = vtanh.pop %v1462
  %v1527 = vtanh.pop %v1463
  %v1528 = vtanh.pop %v1464
  %v1529 = vtanh.pop %v1465
  %v1530 = vtanh.pop %v1466
  %v1531 = vtanh.pop %v1467
  %v1532 = vtanh.pop %v1468
  %v1533 = vtanh.pop %v1469
  %v1534 = vtanh.pop %v1470
  %v1535 = vtanh.pop %v1471
  %v1536 = vtanh.pop %v1472
  %v1537 = vtanh.pop %v1473
  %v1538 = vtanh.pop %v1474
  %v1539 = vtanh.pop %v1475
  %v1540 = vtanh.pop %v1476
  %v1541 = vtanh.pop %v1477
  %v1542 = vtanh.pop %v1478
  %v1543 = vtanh.pop %v1479
  %v1544 = vtanh.pop %v1480
  %v1545 = vtanh.pop %v1481
  %v1546 = vtanh.pop %v1482
  %v1547 = vtanh.pop %v1483
  %v1548 = vtanh.pop %v1484
  %v1549 = vtanh.pop %v1485
  %v1550 = vtanh.pop %v1486
  %v1551 = vtanh.pop %v1487
  %v1552 = vtanh.pop %v1488
  %v1553 = vtanh.pop %v1489
  %v1554 = vtanh.pop %v1490
  %v1555 = vtanh.pop %v1491
  %v1556 = vtanh.pop %v1492
  %v1557 = vtanh.pop %v1493
  %v1558 = vtanh.pop %v1494
  %v1559 = vtanh.pop %v1495
  %v1560 = vtanh.pop %v1496
  %v1561 = vtanh.pop %v1497
  %v1562 = vtanh.pop %v1498
  %v1563 = vtanh.pop %v1499
  %v1564 = vtanh.pop %v1500
  %v1565 = vtanh.pop %v1501
  %v1566 = vtanh.pop %v1502
  %v1567 = vtanh.pop %v1503
  %v1568 = vmul.f32 %v1504, %v1438
  %v1569 = vmul.f32 %v1505, %v1438
  %v1570 = vmul.f32 %v1506, %v1438
  %v1571 = vmul.f32 %v1507, %v1438
  %v1572 = vmul.f32 %v1508, %v1438
  %v1573 = vmul.f32 %v1509, %v1438
  %v1574 = vmul.f32 %v1510, %v1438
  %v1575 = vmul.f32 %v1511, %v1438
  %v1576 = vmul.f32 %v1512, %v1438
  %v1577 = vmul.f32 %v1513, %v1438
  %v1578 = vmul.f32 %v1514, %v1438
  %v1579 = vmul.f32 %v1515, %v1438
  %v1580 = vmul.f32 %v1516, %v1438
  %v1581 = vmul.f32 %v1517, %v1438
  %v1582 = vmul.f32 %v1518, %v1438
  %v1583 = vmul.f32 %v1519, %v1438
  %v1584 = vmul.f32 %v1520, %v1438
  %v1585 = vmul.f32 %v1521, %v1438
  %v1586 = vmul.f32 %v1522, %v1438
  %v1587 = vmul.f32 %v1523, %v1438
  %v1588 = vmul.f32 %v1524, %v1438
  %v1589 = vmul.f32 %v1525, %v1438
  %v1590 = vmul.f32 %v1526, %v1438
  %v1591 = vmul.f32 %v1527, %v1438
  %v1592 = vmul.f32 %v1528, %v1438
  %v1593 = vmul.f32 %v1529, %v1438
  %v1594 = vmul.f32 %v1530, %v1438
  %v1595 = vmul.f32 %v1531, %v1438
  %v1596 = vmul.f32 %v1532, %v1438
  %v1597 = vmul.f32 %v1533, %v1438
  %v1598 = vmul.f32 %v1534, %v1438
  %v1599 = vmul.f32 %v1535, %v1438
  %v1600 = vmul.f32 %v1536, %v1438
  %v1601 = vmul.f32 %v1537, %v1438
  %v1602 = vmul.f32 %v1538, %v1438
  %v1603 = vmul.f32 %v1539, %v1438
  %v1604 = vmul.f32 %v1540, %v1438
  %v1605 = vmul.f32 %v1541, %v1438
  %v1606 = vmul.f32 %v1542, %v1438
  %v1607 = vmul.f32 %v1543, %v1438
  %v1608 = vmul.f32 %v1544, %v1438
  %v1609 = vmul.f32 %v1545, %v1438
  %v1610 = vmul.f32 %v1546, %v1438
  %v1611 = vmul.f32 %v1547, %v1438
  %v1612 = vmul.f32 %v1548, %v1438
  %v1613 = vmul.f32 %v1549, %v1438
  %v1614 = vmul.f32 %v1550, %v1438
  %v1615 = vmul.f32 %v1551, %v1438
  %v1616 = vmul.f32 %v1552, %v1438
  %v1617 = vmul.f32 %v1553, %v1438
  %v1618 = vmul.f32 %v1554, %v1438
  %v1619 = vmul.f32 %v1555, %v1438
  %v1620 = vmul.f32 %v1556, %v1438
  %v1621 = vmul.f32 %v1557, %v1438
  %v1622 = vmul.f32 %v1558, %v1438
  %v1623 = vmul.f32 %v1559, %v1438
  %v1624 = vmul.f32 %v1560, %v1438
  %v1625 = vmul.f32 %v1561, %v1438
  %v1626 = vmul.f32 %v1562, %v1438
  %v1627 = vmul.f32 %v1563, %v1438
  %v1628 = vmul.f32 %v1564, %v1438
  %v1629 = vmul.f32 %v1565, %v1438
  %v1630 = vmul.f32 %v1566, %v1438
  %v1631 = vmul.f32 %v1567, %v1438
  %v1632 = vadd.f32 %v1568, %v1439
  %v1633 = vadd.f32 %v1569, %v1439
  %v1634 = vadd.f32 %v1570, %v1439
  %v1635 = vadd.f32 %v1571, %v1439
  %v1636 = vadd.f32 %v1572, %v1439
  %v1637 = vadd.f32 %v1573, %v1439
  %v1638 = vadd.f32 %v1574, %v1439
  %v1639 = vadd.f32 %v1575, %v1439
  %v1640 = vadd.f32 %v1576, %v1439
  %v1641 = vadd.f32 %v1577, %v1439
  %v1642 = vadd.f32 %v1578, %v1439
  %v1643 = vadd.f32 %v1579, %v1439
  %v1644 = vadd.f32 %v1580, %v1439
  %v1645 = vadd.f32 %v1581, %v1439
  %v1646 = vadd.f32 %v1582, %v1439
  %v1647 = vadd.f32 %v1583, %v1439
  %v1648 = vadd.f32 %v1584, %v1439
  %v1649 = vadd.f32 %v1585, %v1439
  %v1650 = vadd.f32 %v1586, %v1439
  %v1651 = vadd.f32 %v1587, %v1439
  %v1652 = vadd.f32 %v1588, %v1439
  %v1653 = vadd.f32 %v1589, %v1439
  %v1654 = vadd.f32 %v1590, %v1439
  %v1655 = vadd.f32 %v1591, %v1439
  %v1656 = vadd.f32 %v1592, %v1439
  %v1657 = vadd.f32 %v1593, %v1439
  %v1658 = vadd.f32 %v1594, %v1439
  %v1659 = vadd.f32 %v1595, %v1439
  %v1660 = vadd.f32 %v1596, %v1439
  %v1661 = vadd.f32 %v1597, %v1439
  %v1662 = vadd.f32 %v1598, %v1439
  %v1663 = vadd.f32 %v1599, %v1439
  %v1664 = vadd.f32 %v1600, %v1439
  %v1665 = vadd.f32 %v1601, %v1439
  %v1666 = vadd.f32 %v1602, %v1439
  %v1667 = vadd.f32 %v1603, %v1439
  %v1668 = vadd.f32 %v1604, %v1439
  %v1669 = vadd.f32 %v1605, %v1439
  %v1670 = vadd.f32 %v1606, %v1439
  %v1671 = vadd.f32 %v1607, %v1439
  %v1672 = vadd.f32 %v1608, %v1439
  %v1673 = vadd.f32 %v1609, %v1439
  %v1674 = vadd.f32 %v1610, %v1439
  %v1675 = vadd.f32 %v1611, %v1439
  %v1676 = vadd.f32 %v1612, %v1439
  %v1677 = vadd.f32 %v1613, %v1439
  %v1678 = vadd.f32 %v1614, %v1439
  %v1679 = vadd.f32 %v1615, %v1439
  %v1680 = vadd.f32 %v1616, %v1439
  %v1681 = vadd.f32 %v1617, %v1439
  %v1682 = vadd.f32 %v1618, %v1439
  %v1683 = vadd.f32 %v1619, %v1439
  %v1684 = vadd.f32 %v1620, %v1439
  %v1685 = vadd.f32 %v1621, %v1439
  %v1686 = vadd.f32 %v1622, %v1439
  %v1687 = vadd.f32 %v1623, %v1439
  %v1688 = vadd.f32 %v1624, %v1439
  %v1689 = vadd.f32 %v1625, %v1439
  %v1690 = vadd.f32 %v1626, %v1439
  %v1691 = vadd.f32 %v1627, %v1439
  %v1692 = vadd.f32 %v1628, %v1439
  %v1693 = vadd.f32 %v1629, %v1439
  %v1694 = vadd.f32 %v1630, %v1439
  %v1695 = vadd.f32 %v1631, %v1439
  %v1696 = vld [vmem:[%s1] sm:$0xff]
  %v1697 = vld [vmem:[%s1 + $0x8] sm:$0xff]
  %v1698 = vld [vmem:[%s1 + $0x10] sm:$0xff]
  %v1699 = vld [vmem:[%s1 + $0x18] sm:$0xff]
  %v1700 = vld [vmem:[%s1 + $0x20] sm:$0xff]
  %v1701 = vld [vmem:[%s1 + $0x28] sm:$0xff]
  %v1702 = vld [vmem:[%s1 + $0x30] sm:$0xff]
  %v1703 = vld [vmem:[%s1 + $0x38] sm:$0xff]
  %v1704 = vld [vmem:[%s1 + $0x40] sm:$0xff]
  %v1705 = vld [vmem:[%s1 + $0x48] sm:$0xff]
  %v1706 = vld [vmem:[%s1 + $0x50] sm:$0xff]
  %v1707 = vld [vmem:[%s1 + $0x58] sm:$0xff]
  %v1708 = vld [vmem:[%s1 + $0x60] sm:$0xff]
  %v1709 = vld [vmem:[%s1 + $0x68] sm:$0xff]
  %v1710 = vld [vmem:[%s1 + $0x70] sm:$0xff]
  %v1711 = vld [vmem:[%s1 + $0x78] sm:$0xff]
  %v1712 = vld [vmem:[%s1 + $0x80] sm:$0xff]
  %v1713 = vld [vmem:[%s1 + $0x88] sm:$0xff]
  %v1714 = vld [vmem:[%s1 + $0x90] sm:$0xff]
  %v1715 = vld [vmem:[%s1 + $0x98] sm:$0xff]
  %v1716 = vld [vmem:[%s1 + $0xa0] sm:$0xff]
  %v1717 = vld [vmem:[%s1 + $0xa8] sm:$0xff]
  %v1718 = vld [vmem:[%s1 + $0xb0] sm:$0xff]
  %v1719 = vld [vmem:[%s1 + $0xb8] sm:$0xff]
  %v1720 = vld [vmem:[%s1 + $0xc0] sm:$0xff]
  %v1721 = vld [vmem:[%s1 + $0xc8] sm:$0xff]
  %v1722 = vld [vmem:[%s1 + $0xd0] sm:$0xff]
  %v1723 = vld [vmem:[%s1 + $0xd8] sm:$0xff]
  %v1724 = vld [vmem:[%s1 + $0xe0] sm:$0xff]
  %v1725 = vld [vmem:[%s1 + $0xe8] sm:$0xff]
  %v1726 = vld [vmem:[%s1 + $0xf0] sm:$0xff]
  %v1727 = vld [vmem:[%s1 + $0xf8] sm:$0xff]
  %v1728 = vld [vmem:[%s1 + $0x100] sm:$0xff]
  %v1729 = vld [vmem:[%s1 + $0x108] sm:$0xff]
  %v1730 = vld [vmem:[%s1 + $0x110] sm:$0xff]
  %v1731 = vld [vmem:[%s1 + $0x118] sm:$0xff]
  %v1732 = vld [vmem:[%s1 + $0x120] sm:$0xff]
  %v1733 = vld [vmem:[%s1 + $0x128] sm:$0xff]
  %v1734 = vld [vmem:[%s1 + $0x130] sm:$0xff]
  %v1735 = vld [vmem:[%s1 + $0x138] sm:$0xff]
  %v1736 = vld [vmem:[%s1 + $0x140] sm:$0xff]
  %v1737 = vld [vmem:[%s1 + $0x148] sm:$0xff]
  %v1738 = vld [vmem:[%s1 + $0x150] sm:$0xff]
  %v1739 = vld [vmem:[%s1 + $0x158] sm:$0xff]
  %v1740 = vld [vmem:[%s1 + $0x160] sm:$0xff]
  %v1741 = vld [vmem:[%s1 + $0x168] sm:$0xff]
  %v1742 = vld [vmem:[%s1 + $0x170] sm:$0xff]
  %v1743 = vld [vmem:[%s1 + $0x178] sm:$0xff]
  %v1744 = vld [vmem:[%s1 + $0x180] sm:$0xff]
  %v1745 = vld [vmem:[%s1 + $0x188] sm:$0xff]
  %v1746 = vld [vmem:[%s1 + $0x190] sm:$0xff]
  %v1747 = vld [vmem:[%s1 + $0x198] sm:$0xff]
  %v1748 = vld [vmem:[%s1 + $0x1a0] sm:$0xff]
  %v1749 = vld [vmem:[%s1 + $0x1a8] sm:$0xff]
  %v1750 = vld [vmem:[%s1 + $0x1b0] sm:$0xff]
  %v1751 = vld [vmem:[%s1 + $0x1b8] sm:$0xff]
  %v1752 = vld [vmem:[%s1 + $0x1c0] sm:$0xff]
  %v1753 = vld [vmem:[%s1 + $0x1c8] sm:$0xff]
  %v1754 = vld [vmem:[%s1 + $0x1d0] sm:$0xff]
  %v1755 = vld [vmem:[%s1 + $0x1d8] sm:$0xff]
  %v1756 = vld [vmem:[%s1 + $0x1e0] sm:$0xff]
  %v1757 = vld [vmem:[%s1 + $0x1e8] sm:$0xff]
  %v1758 = vld [vmem:[%s1 + $0x1f0] sm:$0xff]
  %v1759 = vld [vmem:[%s1 + $0x1f8] sm:$0xff]
  %1824 = vrot.lane.b32.xlu0 %v1696, 32
  %v1825 = vpop.permute.xlu0 %1824
  %1826 = vrot.lane.b32.xlu0 %v1697, 32
  %v1827 = vpop.permute.xlu0 %1826
  %1828 = vrot.lane.b32.xlu0 %v1698, 32
  %v1829 = vpop.permute.xlu0 %1828
  %1830 = vrot.lane.b32.xlu0 %v1699, 32
  %v1831 = vpop.permute.xlu0 %1830
  %1832 = vrot.lane.b32.xlu0 %v1700, 32
  %v1833 = vpop.permute.xlu0 %1832
  %1834 = vrot.lane.b32.xlu0 %v1701, 32
  %v1835 = vpop.permute.xlu0 %1834
  %1836 = vrot.lane.b32.xlu0 %v1702, 32
  %v1837 = vpop.permute.xlu0 %1836
  %1838 = vrot.lane.b32.xlu0 %v1703, 32
  %v1839 = vpop.permute.xlu0 %1838
  %1840 = vrot.lane.b32.xlu0 %v1704, 32
  %v1841 = vpop.permute.xlu0 %1840
  %1842 = vrot.lane.b32.xlu0 %v1705, 32
  %v1843 = vpop.permute.xlu0 %1842
  %1844 = vrot.lane.b32.xlu0 %v1706, 32
  %v1845 = vpop.permute.xlu0 %1844
  %1846 = vrot.lane.b32.xlu0 %v1707, 32
  %v1847 = vpop.permute.xlu0 %1846
  %1848 = vrot.lane.b32.xlu0 %v1708, 32
  %v1849 = vpop.permute.xlu0 %1848
  %1850 = vrot.lane.b32.xlu0 %v1709, 32
  %v1851 = vpop.permute.xlu0 %1850
  %1852 = vrot.lane.b32.xlu0 %v1710, 32
  %v1853 = vpop.permute.xlu0 %1852
  %1854 = vrot.lane.b32.xlu0 %v1711, 32
  %v1855 = vpop.permute.xlu0 %1854
  %1856 = vrot.lane.b32.xlu0 %v1712, 32
  %v1857 = vpop.permute.xlu0 %1856
  %1858 = vrot.lane.b32.xlu0 %v1713, 32
  %v1859 = vpop.permute.xlu0 %1858
  %1860 = vrot.lane.b32.xlu0 %v1714, 32
  %v1861 = vpop.permute.xlu0 %1860
  %1862 = vrot.lane.b32.xlu0 %v1715, 32
  %v1863 = vpop.permute.xlu0 %1862
  %1864 = vrot.lane.b32.xlu0 %v1716, 32
  %v1865 = vpop.permute.xlu0 %1864
  %1866 = vrot.lane.b32.xlu0 %v1717, 32
  %v1867 = vpop.permute.xlu0 %1866
  %1868 = vrot.lane.b32.xlu0 %v1718, 32
  %v1869 = vpop.permute.xlu0 %1868
  %1870 = vrot.lane.b32.xlu0 %v1719, 32
  %v1871 = vpop.permute.xlu0 %1870
  %1872 = vrot.lane.b32.xlu0 %v1720, 32
  %v1873 = vpop.permute.xlu0 %1872
  %1874 = vrot.lane.b32.xlu0 %v1721, 32
  %v1875 = vpop.permute.xlu0 %1874
  %1876 = vrot.lane.b32.xlu0 %v1722, 32
  %v1877 = vpop.permute.xlu0 %1876
  %1878 = vrot.lane.b32.xlu0 %v1723, 32
  %v1879 = vpop.permute.xlu0 %1878
  %1880 = vrot.lane.b32.xlu0 %v1724, 32
  %v1881 = vpop.permute.xlu0 %1880
  %1882 = vrot.lane.b32.xlu0 %v1725, 32
  %v1883 = vpop.permute.xlu0 %1882
  %1884 = vrot.lane.b32.xlu0 %v1726, 32
  %v1885 = vpop.permute.xlu0 %1884
  %1886 = vrot.lane.b32.xlu0 %v1727, 32
  %v1887 = vpop.permute.xlu0 %1886
  %1888 = vrot.lane.b32.xlu0 %v1728, 32
  %v1889 = vpop.permute.xlu0 %1888
  %1890 = vrot.lane.b32.xlu0 %v1729, 32
  %v1891 = vpop.permute.xlu0 %1890
  %1892 = vrot.lane.b32.xlu0 %v1730, 32
  %v1893 = vpop.permute.xlu0 %1892
  %1894 = vrot.lane.b32.xlu0 %v1731, 32
  %v1895 = vpop.permute.xlu0 %1894
  %1896 = vrot.lane.b32.xlu0 %v1732, 32
  %v1897 = vpop.permute.xlu0 %1896
  %1898 = vrot.lane.b32.xlu0 %v1733, 32
  %v1899 = vpop.permute.xlu0 %1898
  %1900 = vrot.lane.b32.xlu0 %v1734, 32
  %v1901 = vpop.permute.xlu0 %1900
  %1902 = vrot.lane.b32.xlu0 %v1735, 32
  %v1903 = vpop.permute.xlu0 %1902
  %1904 = vrot.lane.b32.xlu0 %v1736, 32
  %v1905 = vpop.permute.xlu0 %1904
  %1906 = vrot.lane.b32.xlu0 %v1737, 32
  %v1907 = vpop.permute.xlu0 %1906
  %1908 = vrot.lane.b32.xlu0 %v1738, 32
  %v1909 = vpop.permute.xlu0 %1908
  %1910 = vrot.lane.b32.xlu0 %v1739, 32
  %v1911 = vpop.permute.xlu0 %1910
  %1912 = vrot.lane.b32.xlu0 %v1740, 32
  %v1913 = vpop.permute.xlu0 %1912
  %1914 = vrot.lane.b32.xlu0 %v1741, 32
  %v1915 = vpop.permute.xlu0 %1914
  %1916 = vrot.lane.b32.xlu0 %v1742, 32
  %v1917 = vpop.permute.xlu0 %1916
  %1918 = vrot.lane.b32.xlu0 %v1743, 32
  %v1919 = vpop.permute.xlu0 %1918
  %1920 = vrot.lane.b32.xlu0 %v1744, 32
  %v1921 = vpop.permute.xlu0 %1920
  %1922 = vrot.lane.b32.xlu0 %v1745, 32
  %v1923 = vpop.permute.xlu0 %1922
  %1924 = vrot.lane.b32.xlu0 %v1746, 32
  %v1925 = vpop.permute.xlu0 %1924
  %1926 = vrot.lane.b32.xlu0 %v1747, 32
  %v1927 = vpop.permute.xlu0 %1926
  %1928 = vrot.lane.b32.xlu0 %v1748, 32
  %v1929 = vpop.permute.xlu0 %1928
  %1930 = vrot.lane.b32.xlu0 %v1749, 32
  %v1931 = vpop.permute.xlu0 %1930
  %1932 = vrot.lane.b32.xlu0 %v1750, 32
  %v1933 = vpop.permute.xlu0 %1932
  %1934 = vrot.lane.b32.xlu0 %v1751, 32
  %v1935 = vpop.permute.xlu0 %1934
  %1936 = vrot.lane.b32.xlu0 %v1752, 32
  %v1937 = vpop.permute.xlu0 %1936
  %1938 = vrot.lane.b32.xlu0 %v1753, 32
  %v1939 = vpop.permute.xlu0 %1938
  %1940 = vrot.lane.b32.xlu0 %v1754, 32
  %v1941 = vpop.permute.xlu0 %1940
  %1942 = vrot.lane.b32.xlu0 %v1755, 32
  %v1943 = vpop.permute.xlu0 %1942
  %1944 = vrot.lane.b32.xlu0 %v1756, 32
  %v1945 = vpop.permute.xlu0 %1944
  %1946 = vrot.lane.b32.xlu0 %v1757, 32
  %v1947 = vpop.permute.xlu0 %1946
  %1948 = vrot.lane.b32.xlu0 %v1758, 32
  %v1949 = vpop.permute.xlu0 %1948
  %1950 = vrot.lane.b32.xlu0 %v1759, 32
  %v1951 = vpop.permute.xlu0 %1950
  %v2016 = vmul.f32 %v1632, %v1825
  %v2017 = vmul.f32 %v1633, %v1827
  %v2018 = vmul.f32 %v1634, %v1829
  %v2019 = vmul.f32 %v1635, %v1831
  %v2020 = vmul.f32 %v1636, %v1833
  %v2021 = vmul.f32 %v1637, %v1835
  %v2022 = vmul.f32 %v1638, %v1837
  %v2023 = vmul.f32 %v1639, %v1839
  %v2024 = vmul.f32 %v1640, %v1841
  %v2025 = vmul.f32 %v1641, %v1843
  %v2026 = vmul.f32 %v1642, %v1845
  %v2027 = vmul.f32 %v1643, %v1847
  %v2028 = vmul.f32 %v1644, %v1849
  %v2029 = vmul.f32 %v1645, %v1851
  %v2030 = vmul.f32 %v1646, %v1853
  %v2031 = vmul.f32 %v1647, %v1855
  %v2032 = vmul.f32 %v1648, %v1857
  %v2033 = vmul.f32 %v1649, %v1859
  %v2034 = vmul.f32 %v1650, %v1861
  %v2035 = vmul.f32 %v1651, %v1863
  %v2036 = vmul.f32 %v1652, %v1865
  %v2037 = vmul.f32 %v1653, %v1867
  %v2038 = vmul.f32 %v1654, %v1869
  %v2039 = vmul.f32 %v1655, %v1871
  %v2040 = vmul.f32 %v1656, %v1873
  %v2041 = vmul.f32 %v1657, %v1875
  %v2042 = vmul.f32 %v1658, %v1877
  %v2043 = vmul.f32 %v1659, %v1879
  %v2044 = vmul.f32 %v1660, %v1881
  %v2045 = vmul.f32 %v1661, %v1883
  %v2046 = vmul.f32 %v1662, %v1885
  %v2047 = vmul.f32 %v1663, %v1887
  %v2048 = vmul.f32 %v1664, %v1889
  %v2049 = vmul.f32 %v1665, %v1891
  %v2050 = vmul.f32 %v1666, %v1893
  %v2051 = vmul.f32 %v1667, %v1895
  %v2052 = vmul.f32 %v1668, %v1897
  %v2053 = vmul.f32 %v1669, %v1899
  %v2054 = vmul.f32 %v1670, %v1901
  %v2055 = vmul.f32 %v1671, %v1903
  %v2056 = vmul.f32 %v1672, %v1905
  %v2057 = vmul.f32 %v1673, %v1907
  %v2058 = vmul.f32 %v1674, %v1909
  %v2059 = vmul.f32 %v1675, %v1911
  %v2060 = vmul.f32 %v1676, %v1913
  %v2061 = vmul.f32 %v1677, %v1915
  %v2062 = vmul.f32 %v1678, %v1917
  %v2063 = vmul.f32 %v1679, %v1919
  %v2064 = vmul.f32 %v1680, %v1921
  %v2065 = vmul.f32 %v1681, %v1923
  %v2066 = vmul.f32 %v1682, %v1925
  %v2067 = vmul.f32 %v1683, %v1927
  %v2068 = vmul.f32 %v1684, %v1929
  %v2069 = vmul.f32 %v1685, %v1931
  %v2070 = vmul.f32 %v1686, %v1933
  %v2071 = vmul.f32 %v1687, %v1935
  %v2072 = vmul.f32 %v1688, %v1937
  %v2073 = vmul.f32 %v1689, %v1939
  %v2074 = vmul.f32 %v1690, %v1941
  %v2075 = vmul.f32 %v1691, %v1943
  %v2076 = vmul.f32 %v1692, %v1945
  %v2077 = vmul.f32 %v1693, %v1947
  %v2078 = vmul.f32 %v1694, %v1949
  %v2079 = vmul.f32 %v1695, %v1951
  %2144 = vrot.lane.b32.xlu0 %v1632, 32
  %v2145 = vpop.permute.xlu0 %2144
  %2146 = vrot.lane.b32.xlu0 %v1633, 32
  %v2147 = vpop.permute.xlu0 %2146
  %2148 = vrot.lane.b32.xlu0 %v1634, 32
  %v2149 = vpop.permute.xlu0 %2148
  %2150 = vrot.lane.b32.xlu0 %v1635, 32
  %v2151 = vpop.permute.xlu0 %2150
  %2152 = vrot.lane.b32.xlu0 %v1636, 32
  %v2153 = vpop.permute.xlu0 %2152
  %2154 = vrot.lane.b32.xlu0 %v1637, 32
  %v2155 = vpop.permute.xlu0 %2154
  %2156 = vrot.lane.b32.xlu0 %v1638, 32
  %v2157 = vpop.permute.xlu0 %2156
  %2158 = vrot.lane.b32.xlu0 %v1639, 32
  %v2159 = vpop.permute.xlu0 %2158
  %2160 = vrot.lane.b32.xlu0 %v1640, 32
  %v2161 = vpop.permute.xlu0 %2160
  %2162 = vrot.lane.b32.xlu0 %v1641, 32
  %v2163 = vpop.permute.xlu0 %2162
  %2164 = vrot.lane.b32.xlu0 %v1642, 32
  %v2165 = vpop.permute.xlu0 %2164
  %2166 = vrot.lane.b32.xlu0 %v1643, 32
  %v2167 = vpop.permute.xlu0 %2166
  %2168 = vrot.lane.b32.xlu0 %v1644, 32
  %v2169 = vpop.permute.xlu0 %2168
  %2170 = vrot.lane.b32.xlu0 %v1645, 32
  %v2171 = vpop.permute.xlu0 %2170
  %2172 = vrot.lane.b32.xlu0 %v1646, 32
  %v2173 = vpop.permute.xlu0 %2172
  %2174 = vrot.lane.b32.xlu0 %v1647, 32
  %v2175 = vpop.permute.xlu0 %2174
  %2176 = vrot.lane.b32.xlu0 %v1648, 32
  %v2177 = vpop.permute.xlu0 %2176
  %2178 = vrot.lane.b32.xlu0 %v1649, 32
  %v2179 = vpop.permute.xlu0 %2178
  %2180 = vrot.lane.b32.xlu0 %v1650, 32
  %v2181 = vpop.permute.xlu0 %2180
  %2182 = vrot.lane.b32.xlu0 %v1651, 32
  %v2183 = vpop.permute.xlu0 %2182
  %2184 = vrot.lane.b32.xlu0 %v1652, 32
  %v2185 = vpop.permute.xlu0 %2184
  %2186 = vrot.lane.b32.xlu0 %v1653, 32
  %v2187 = vpop.permute.xlu0 %2186
  %2188 = vrot.lane.b32.xlu0 %v1654, 32
  %v2189 = vpop.permute.xlu0 %2188
  %2190 = vrot.lane.b32.xlu0 %v1655, 32
  %v2191 = vpop.permute.xlu0 %2190
  %2192 = vrot.lane.b32.xlu0 %v1656, 32
  %v2193 = vpop.permute.xlu0 %2192
  %2194 = vrot.lane.b32.xlu0 %v1657, 32
  %v2195 = vpop.permute.xlu0 %2194
  %2196 = vrot.lane.b32.xlu0 %v1658, 32
  %v2197 = vpop.permute.xlu0 %2196
  %2198 = vrot.lane.b32.xlu0 %v1659, 32
  %v2199 = vpop.permute.xlu0 %2198
  %2200 = vrot.lane.b32.xlu0 %v1660, 32
  %v2201 = vpop.permute.xlu0 %2200
  %2202 = vrot.lane.b32.xlu0 %v1661, 32
  %v2203 = vpop.permute.xlu0 %2202
  %2204 = vrot.lane.b32.xlu0 %v1662, 32
  %v2205 = vpop.permute.xlu0 %2204
  %2206 = vrot.lane.b32.xlu0 %v1663, 32
  %v2207 = vpop.permute.xlu0 %2206
  %2208 = vrot.lane.b32.xlu0 %v1664, 32
  %v2209 = vpop.permute.xlu0 %2208
  %2210 = vrot.lane.b32.xlu0 %v1665, 32
  %v2211 = vpop.permute.xlu0 %2210
  %2212 = vrot.lane.b32.xlu0 %v1666, 32
  %v2213 = vpop.permute.xlu0 %2212
  %2214 = vrot.lane.b32.xlu0 %v1667, 32
  %v2215 = vpop.permute.xlu0 %2214
  %2216 = vrot.lane.b32.xlu0 %v1668, 32
  %v2217 = vpop.permute.xlu0 %2216
  %2218 = vrot.lane.b32.xlu0 %v1669, 32
  %v2219 = vpop.permute.xlu0 %2218
  %2220 = vrot.lane.b32.xlu0 %v1670, 32
  %v2221 = vpop.permute.xlu0 %2220
  %2222 = vrot.lane.b32.xlu0 %v1671, 32
  %v2223 = vpop.permute.xlu0 %2222
  %2224 = vrot.lane.b32.xlu0 %v1672, 32
  %v2225 = vpop.permute.xlu0 %2224
  %2226 = vrot.lane.b32.xlu0 %v1673, 32
  %v2227 = vpop.permute.xlu0 %2226
  %2228 = vrot.lane.b32.xlu0 %v1674, 32
  %v2229 = vpop.permute.xlu0 %2228
  %2230 = vrot.lane.b32.xlu0 %v1675, 32
  %v2231 = vpop.permute.xlu0 %2230
  %2232 = vrot.lane.b32.xlu0 %v1676, 32
  %v2233 = vpop.permute.xlu0 %2232
  %2234 = vrot.lane.b32.xlu0 %v1677, 32
  %v2235 = vpop.permute.xlu0 %2234
  %2236 = vrot.lane.b32.xlu0 %v1678, 32
  %v2237 = vpop.permute.xlu0 %2236
  %2238 = vrot.lane.b32.xlu0 %v1679, 32
  %v2239 = vpop.permute.xlu0 %2238
  %2240 = vrot.lane.b32.xlu0 %v1680, 32
  %v2241 = vpop.permute.xlu0 %2240
  %2242 = vrot.lane.b32.xlu0 %v1681, 32
  %v2243 = vpop.permute.xlu0 %2242
  %2244 = vrot.lane.b32.xlu0 %v1682, 32
  %v2245 = vpop.permute.xlu0 %2244
  %2246 = vrot.lane.b32.xlu0 %v1683, 32
  %v2247 = vpop.permute.xlu0 %2246
  %2248 = vrot.lane.b32.xlu0 %v1684, 32
  %v2249 = vpop.permute.xlu0 %2248
  %2250 = vrot.lane.b32.xlu0 %v1685, 32
  %v2251 = vpop.permute.xlu0 %2250
  %2252 = vrot.lane.b32.xlu0 %v1686, 32
  %v2253 = vpop.permute.xlu0 %2252
  %2254 = vrot.lane.b32.xlu0 %v1687, 32
  %v2255 = vpop.permute.xlu0 %2254
  %2256 = vrot.lane.b32.xlu0 %v1688, 32
  %v2257 = vpop.permute.xlu0 %2256
  %2258 = vrot.lane.b32.xlu0 %v1689, 32
  %v2259 = vpop.permute.xlu0 %2258
  %2260 = vrot.lane.b32.xlu0 %v1690, 32
  %v2261 = vpop.permute.xlu0 %2260
  %2262 = vrot.lane.b32.xlu0 %v1691, 32
  %v2263 = vpop.permute.xlu0 %2262
  %2264 = vrot.lane.b32.xlu0 %v1692, 32
  %v2265 = vpop.permute.xlu0 %2264
  %2266 = vrot.lane.b32.xlu0 %v1693, 32
  %v2267 = vpop.permute.xlu0 %2266
  %2268 = vrot.lane.b32.xlu0 %v1694, 32
  %v2269 = vpop.permute.xlu0 %2268
  %2270 = vrot.lane.b32.xlu0 %v1695, 32
  %v2271 = vpop.permute.xlu0 %2270
  %v2336 = vmul.f32 %v1632, %v2145
  %v2337 = vmul.f32 %v1633, %v2147
  %v2338 = vmul.f32 %v1634, %v2149
  %v2339 = vmul.f32 %v1635, %v2151
  %v2340 = vmul.f32 %v1636, %v2153
  %v2341 = vmul.f32 %v1637, %v2155
  %v2342 = vmul.f32 %v1638, %v2157
  %v2343 = vmul.f32 %v1639, %v2159
  %v2344 = vmul.f32 %v1640, %v2161
  %v2345 = vmul.f32 %v1641, %v2163
  %v2346 = vmul.f32 %v1642, %v2165
  %v2347 = vmul.f32 %v1643, %v2167
  %v2348 = vmul.f32 %v1644, %v2169
  %v2349 = vmul.f32 %v1645, %v2171
  %v2350 = vmul.f32 %v1646, %v2173
  %v2351 = vmul.f32 %v1647, %v2175
  %v2352 = vmul.f32 %v1648, %v2177
  %v2353 = vmul.f32 %v1649, %v2179
  %v2354 = vmul.f32 %v1650, %v2181
  %v2355 = vmul.f32 %v1651, %v2183
  %v2356 = vmul.f32 %v1652, %v2185
  %v2357 = vmul.f32 %v1653, %v2187
  %v2358 = vmul.f32 %v1654, %v2189
  %v2359 = vmul.f32 %v1655, %v2191
  %v2360 = vmul.f32 %v1656, %v2193
  %v2361 = vmul.f32 %v1657, %v2195
  %v2362 = vmul.f32 %v1658, %v2197
  %v2363 = vmul.f32 %v1659, %v2199
  %v2364 = vmul.f32 %v1660, %v2201
  %v2365 = vmul.f32 %v1661, %v2203
  %v2366 = vmul.f32 %v1662, %v2205
  %v2367 = vmul.f32 %v1663, %v2207
  %v2368 = vmul.f32 %v1664, %v2209
  %v2369 = vmul.f32 %v1665, %v2211
  %v2370 = vmul.f32 %v1666, %v2213
  %v2371 = vmul.f32 %v1667, %v2215
  %v2372 = vmul.f32 %v1668, %v2217
  %v2373 = vmul.f32 %v1669, %v2219
  %v2374 = vmul.f32 %v1670, %v2221
  %v2375 = vmul.f32 %v1671, %v2223
  %v2376 = vmul.f32 %v1672, %v2225
  %v2377 = vmul.f32 %v1673, %v2227
  %v2378 = vmul.f32 %v1674, %v2229
  %v2379 = vmul.f32 %v1675, %v2231
  %v2380 = vmul.f32 %v1676, %v2233
  %v2381 = vmul.f32 %v1677, %v2235
  %v2382 = vmul.f32 %v1678, %v2237
  %v2383 = vmul.f32 %v1679, %v2239
  %v2384 = vmul.f32 %v1680, %v2241
  %v2385 = vmul.f32 %v1681, %v2243
  %v2386 = vmul.f32 %v1682, %v2245
  %v2387 = vmul.f32 %v1683, %v2247
  %v2388 = vmul.f32 %v1684, %v2249
  %v2389 = vmul.f32 %v1685, %v2251
  %v2390 = vmul.f32 %v1686, %v2253
  %v2391 = vmul.f32 %v1687, %v2255
  %v2392 = vmul.f32 %v1688, %v2257
  %v2393 = vmul.f32 %v1689, %v2259
  %v2394 = vmul.f32 %v1690, %v2261
  %v2395 = vmul.f32 %v1691, %v2263
  %v2396 = vmul.f32 %v1692, %v2265
  %v2397 = vmul.f32 %v1693, %v2267
  %v2398 = vmul.f32 %v1694, %v2269
  %v2399 = vmul.f32 %v1695, %v2271
  %2464 = vrot.lane.b32.xlu0 %v2336, 32
  %v2465 = vpop.permute.xlu0 %2464
  %2466 = vrot.lane.b32.xlu0 %v2337, 32
  %v2467 = vpop.permute.xlu0 %2466
  %2468 = vrot.lane.b32.xlu0 %v2338, 32
  %v2469 = vpop.permute.xlu0 %2468
  %2470 = vrot.lane.b32.xlu0 %v2339, 32
  %v2471 = vpop.permute.xlu0 %2470
  %2472 = vrot.lane.b32.xlu0 %v2340, 32
  %v2473 = vpop.permute.xlu0 %2472
  %2474 = vrot.lane.b32.xlu0 %v2341, 32
  %v2475 = vpop.permute.xlu0 %2474
  %2476 = vrot.lane.b32.xlu0 %v2342, 32
  %v2477 = vpop.permute.xlu0 %2476
  %2478 = vrot.lane.b32.xlu0 %v2343, 32
  %v2479 = vpop.permute.xlu0 %2478
  %2480 = vrot.lane.b32.xlu0 %v2344, 32
  %v2481 = vpop.permute.xlu0 %2480
  %2482 = vrot.lane.b32.xlu0 %v2345, 32
  %v2483 = vpop.permute.xlu0 %2482
  %2484 = vrot.lane.b32.xlu0 %v2346, 32
  %v2485 = vpop.permute.xlu0 %2484
  %2486 = vrot.lane.b32.xlu0 %v2347, 32
  %v2487 = vpop.permute.xlu0 %2486
  %2488 = vrot.lane.b32.xlu0 %v2348, 32
  %v2489 = vpop.permute.xlu0 %2488
  %2490 = vrot.lane.b32.xlu0 %v2349, 32
  %v2491 = vpop.permute.xlu0 %2490
  %2492 = vrot.lane.b32.xlu0 %v2350, 32
  %v2493 = vpop.permute.xlu0 %2492
  %2494 = vrot.lane.b32.xlu0 %v2351, 32
  %v2495 = vpop.permute.xlu0 %2494
  %2496 = vrot.lane.b32.xlu0 %v2352, 32
  %v2497 = vpop.permute.xlu0 %2496
  %2498 = vrot.lane.b32.xlu0 %v2353, 32
  %v2499 = vpop.permute.xlu0 %2498
  %2500 = vrot.lane.b32.xlu0 %v2354, 32
  %v2501 = vpop.permute.xlu0 %2500
  %2502 = vrot.lane.b32.xlu0 %v2355, 32
  %v2503 = vpop.permute.xlu0 %2502
  %2504 = vrot.lane.b32.xlu0 %v2356, 32
  %v2505 = vpop.permute.xlu0 %2504
  %2506 = vrot.lane.b32.xlu0 %v2357, 32
  %v2507 = vpop.permute.xlu0 %2506
  %2508 = vrot.lane.b32.xlu0 %v2358, 32
  %v2509 = vpop.permute.xlu0 %2508
  %2510 = vrot.lane.b32.xlu0 %v2359, 32
  %v2511 = vpop.permute.xlu0 %2510
  %2512 = vrot.lane.b32.xlu0 %v2360, 32
  %v2513 = vpop.permute.xlu0 %2512
  %2514 = vrot.lane.b32.xlu0 %v2361, 32
  %v2515 = vpop.permute.xlu0 %2514
  %2516 = vrot.lane.b32.xlu0 %v2362, 32
  %v2517 = vpop.permute.xlu0 %2516
  %2518 = vrot.lane.b32.xlu0 %v2363, 32
  %v2519 = vpop.permute.xlu0 %2518
  %2520 = vrot.lane.b32.xlu0 %v2364, 32
  %v2521 = vpop.permute.xlu0 %2520
  %2522 = vrot.lane.b32.xlu0 %v2365, 32
  %v2523 = vpop.permute.xlu0 %2522
  %2524 = vrot.lane.b32.xlu0 %v2366, 32
  %v2525 = vpop.permute.xlu0 %2524
  %2526 = vrot.lane.b32.xlu0 %v2367, 32
  %v2527 = vpop.permute.xlu0 %2526
  %2528 = vrot.lane.b32.xlu0 %v2368, 32
  %v2529 = vpop.permute.xlu0 %2528
  %2530 = vrot.lane.b32.xlu0 %v2369, 32
  %v2531 = vpop.permute.xlu0 %2530
  %2532 = vrot.lane.b32.xlu0 %v2370, 32
  %v2533 = vpop.permute.xlu0 %2532
  %2534 = vrot.lane.b32.xlu0 %v2371, 32
  %v2535 = vpop.permute.xlu0 %2534
  %2536 = vrot.lane.b32.xlu0 %v2372, 32
  %v2537 = vpop.permute.xlu0 %2536
  %2538 = vrot.lane.b32.xlu0 %v2373, 32
  %v2539 = vpop.permute.xlu0 %2538
  %2540 = vrot.lane.b32.xlu0 %v2374, 32
  %v2541 = vpop.permute.xlu0 %2540
  %2542 = vrot.lane.b32.xlu0 %v2375, 32
  %v2543 = vpop.permute.xlu0 %2542
  %2544 = vrot.lane.b32.xlu0 %v2376, 32
  %v2545 = vpop.permute.xlu0 %2544
  %2546 = vrot.lane.b32.xlu0 %v2377, 32
  %v2547 = vpop.permute.xlu0 %2546
  %2548 = vrot.lane.b32.xlu0 %v2378, 32
  %v2549 = vpop.permute.xlu0 %2548
  %2550 = vrot.lane.b32.xlu0 %v2379, 32
  %v2551 = vpop.permute.xlu0 %2550
  %2552 = vrot.lane.b32.xlu0 %v2380, 32
  %v2553 = vpop.permute.xlu0 %2552
  %2554 = vrot.lane.b32.xlu0 %v2381, 32
  %v2555 = vpop.permute.xlu0 %2554
  %2556 = vrot.lane.b32.xlu0 %v2382, 32
  %v2557 = vpop.permute.xlu0 %2556
  %2558 = vrot.lane.b32.xlu0 %v2383, 32
  %v2559 = vpop.permute.xlu0 %2558
  %2560 = vrot.lane.b32.xlu0 %v2384, 32
  %v2561 = vpop.permute.xlu0 %2560
  %2562 = vrot.lane.b32.xlu0 %v2385, 32
  %v2563 = vpop.permute.xlu0 %2562
  %2564 = vrot.lane.b32.xlu0 %v2386, 32
  %v2565 = vpop.permute.xlu0 %2564
  %2566 = vrot.lane.b32.xlu0 %v2387, 32
  %v2567 = vpop.permute.xlu0 %2566
  %2568 = vrot.lane.b32.xlu0 %v2388, 32
  %v2569 = vpop.permute.xlu0 %2568
  %2570 = vrot.lane.b32.xlu0 %v2389, 32
  %v2571 = vpop.permute.xlu0 %2570
  %2572 = vrot.lane.b32.xlu0 %v2390, 32
  %v2573 = vpop.permute.xlu0 %2572
  %2574 = vrot.lane.b32.xlu0 %v2391, 32
  %v2575 = vpop.permute.xlu0 %2574
  %2576 = vrot.lane.b32.xlu0 %v2392, 32
  %v2577 = vpop.permute.xlu0 %2576
  %2578 = vrot.lane.b32.xlu0 %v2393, 32
  %v2579 = vpop.permute.xlu0 %2578
  %2580 = vrot.lane.b32.xlu0 %v2394, 32
  %v2581 = vpop.permute.xlu0 %2580
  %2582 = vrot.lane.b32.xlu0 %v2395, 32
  %v2583 = vpop.permute.xlu0 %2582
  %2584 = vrot.lane.b32.xlu0 %v2396, 32
  %v2585 = vpop.permute.xlu0 %2584
  %2586 = vrot.lane.b32.xlu0 %v2397, 32
  %v2587 = vpop.permute.xlu0 %2586
  %2588 = vrot.lane.b32.xlu0 %v2398, 32
  %v2589 = vpop.permute.xlu0 %2588
  %2590 = vrot.lane.b32.xlu0 %v2399, 32
  %v2591 = vpop.permute.xlu0 %2590
  %v2656 = vadd.f32 %v2016, %v2465
  %v2657 = vadd.f32 %v2017, %v2467
  %v2658 = vadd.f32 %v2018, %v2469
  %v2659 = vadd.f32 %v2019, %v2471
  %v2660 = vadd.f32 %v2020, %v2473
  %v2661 = vadd.f32 %v2021, %v2475
  %v2662 = vadd.f32 %v2022, %v2477
  %v2663 = vadd.f32 %v2023, %v2479
  %v2664 = vadd.f32 %v2024, %v2481
  %v2665 = vadd.f32 %v2025, %v2483
  %v2666 = vadd.f32 %v2026, %v2485
  %v2667 = vadd.f32 %v2027, %v2487
  %v2668 = vadd.f32 %v2028, %v2489
  %v2669 = vadd.f32 %v2029, %v2491
  %v2670 = vadd.f32 %v2030, %v2493
  %v2671 = vadd.f32 %v2031, %v2495
  %v2672 = vadd.f32 %v2032, %v2497
  %v2673 = vadd.f32 %v2033, %v2499
  %v2674 = vadd.f32 %v2034, %v2501
  %v2675 = vadd.f32 %v2035, %v2503
  %v2676 = vadd.f32 %v2036, %v2505
  %v2677 = vadd.f32 %v2037, %v2507
  %v2678 = vadd.f32 %v2038, %v2509
  %v2679 = vadd.f32 %v2039, %v2511
  %v2680 = vadd.f32 %v2040, %v2513
  %v2681 = vadd.f32 %v2041, %v2515
  %v2682 = vadd.f32 %v2042, %v2517
  %v2683 = vadd.f32 %v2043, %v2519
  %v2684 = vadd.f32 %v2044, %v2521
  %v2685 = vadd.f32 %v2045, %v2523
  %v2686 = vadd.f32 %v2046, %v2525
  %v2687 = vadd.f32 %v2047, %v2527
  %v2688 = vadd.f32 %v2048, %v2529
  %v2689 = vadd.f32 %v2049, %v2531
  %v2690 = vadd.f32 %v2050, %v2533
  %v2691 = vadd.f32 %v2051, %v2535
  %v2692 = vadd.f32 %v2052, %v2537
  %v2693 = vadd.f32 %v2053, %v2539
  %v2694 = vadd.f32 %v2054, %v2541
  %v2695 = vadd.f32 %v2055, %v2543
  %v2696 = vadd.f32 %v2056, %v2545
  %v2697 = vadd.f32 %v2057, %v2547
  %v2698 = vadd.f32 %v2058, %v2549
  %v2699 = vadd.f32 %v2059, %v2551
  %v2700 = vadd.f32 %v2060, %v2553
  %v2701 = vadd.f32 %v2061, %v2555
  %v2702 = vadd.f32 %v2062, %v2557
  %v2703 = vadd.f32 %v2063, %v2559
  %v2704 = vadd.f32 %v2064, %v2561
  %v2705 = vadd.f32 %v2065, %v2563
  %v2706 = vadd.f32 %v2066, %v2565
  %v2707 = vadd.f32 %v2067, %v2567
  %v2708 = vadd.f32 %v2068, %v2569
  %v2709 = vadd.f32 %v2069, %v2571
  %v2710 = vadd.f32 %v2070, %v2573
  %v2711 = vadd.f32 %v2071, %v2575
  %v2712 = vadd.f32 %v2072, %v2577
  %v2713 = vadd.f32 %v2073, %v2579
  %v2714 = vadd.f32 %v2074, %v2581
  %v2715 = vadd.f32 %v2075, %v2583
  %v2716 = vadd.f32 %v2076, %v2585
  %v2717 = vadd.f32 %v2077, %v2587
  %v2718 = vadd.f32 %v2078, %v2589
  %v2719 = vadd.f32 %v2079, %v2591
  %v2720 = vtanh.pop %v2656
  %v2721 = vtanh.pop %v2657
  %v2722 = vtanh.pop %v2658
  %v2723 = vtanh.pop %v2659
  %v2724 = vtanh.pop %v2660
  %v2725 = vtanh.pop %v2661
  %v2726 = vtanh.pop %v2662
  %v2727 = vtanh.pop %v2663
  %v2728 = vtanh.pop %v2664
  %v2729 = vtanh.pop %v2665
  %v2730 = vtanh.pop %v2666
  %v2731 = vtanh.pop %v2667
  %v2732 = vtanh.pop %v2668
  %v2733 = vtanh.pop %v2669
  %v2734 = vtanh.pop %v2670
  %v2735 = vtanh.pop %v2671
  %v2736 = vtanh.pop %v2672
  %v2737 = vtanh.pop %v2673
  %v2738 = vtanh.pop %v2674
  %v2739 = vtanh.pop %v2675
  %v2740 = vtanh.pop %v2676
  %v2741 = vtanh.pop %v2677
  %v2742 = vtanh.pop %v2678
  %v2743 = vtanh.pop %v2679
  %v2744 = vtanh.pop %v2680
  %v2745 = vtanh.pop %v2681
  %v2746 = vtanh.pop %v2682
  %v2747 = vtanh.pop %v2683
  %v2748 = vtanh.pop %v2684
  %v2749 = vtanh.pop %v2685
  %v2750 = vtanh.pop %v2686
  %v2751 = vtanh.pop %v2687
  %v2752 = vtanh.pop %v2688
  %v2753 = vtanh.pop %v2689
  %v2754 = vtanh.pop %v2690
  %v2755 = vtanh.pop %v2691
  %v2756 = vtanh.pop %v2692
  %v2757 = vtanh.pop %v2693
  %v2758 = vtanh.pop %v2694
  %v2759 = vtanh.pop %v2695
  %v2760 = vtanh.pop %v2696
  %v2761 = vtanh.pop %v2697
  %v2762 = vtanh.pop %v2698
  %v2763 = vtanh.pop %v2699
  %v2764 = vtanh.pop %v2700
  %v2765 = vtanh.pop %v2701
  %v2766 = vtanh.pop %v2702
  %v2767 = vtanh.pop %v2703
  %v2768 = vtanh.pop %v2704
  %v2769 = vtanh.pop %v2705
  %v2770 = vtanh.pop %v2706
  %v2771 = vtanh.pop %v2707
  %v2772 = vtanh.pop %v2708
  %v2773 = vtanh.pop %v2709
  %v2774 = vtanh.pop %v2710
  %v2775 = vtanh.pop %v2711
  %v2776 = vtanh.pop %v2712
  %v2777 = vtanh.pop %v2713
  %v2778 = vtanh.pop %v2714
  %v2779 = vtanh.pop %v2715
  %v2780 = vtanh.pop %v2716
  %v2781 = vtanh.pop %v2717
  %v2782 = vtanh.pop %v2718
  %v2783 = vtanh.pop %v2719
  %2848 = vrot.lane.b32.xlu0 %v2720, 32
  %v2849 = vpop.permute.xlu0 %2848
  %2850 = vrot.lane.b32.xlu0 %v2721, 32
  %v2851 = vpop.permute.xlu0 %2850
  %2852 = vrot.lane.b32.xlu0 %v2722, 32
  %v2853 = vpop.permute.xlu0 %2852
  %2854 = vrot.lane.b32.xlu0 %v2723, 32
  %v2855 = vpop.permute.xlu0 %2854
  %2856 = vrot.lane.b32.xlu0 %v2724, 32
  %v2857 = vpop.permute.xlu0 %2856
  %2858 = vrot.lane.b32.xlu0 %v2725, 32
  %v2859 = vpop.permute.xlu0 %2858
  %2860 = vrot.lane.b32.xlu0 %v2726, 32
  %v2861 = vpop.permute.xlu0 %2860
  %2862 = vrot.lane.b32.xlu0 %v2727, 32
  %v2863 = vpop.permute.xlu0 %2862
  %2864 = vrot.lane.b32.xlu0 %v2728, 32
  %v2865 = vpop.permute.xlu0 %2864
  %2866 = vrot.lane.b32.xlu0 %v2729, 32
  %v2867 = vpop.permute.xlu0 %2866
  %2868 = vrot.lane.b32.xlu0 %v2730, 32
  %v2869 = vpop.permute.xlu0 %2868
  %2870 = vrot.lane.b32.xlu0 %v2731, 32
  %v2871 = vpop.permute.xlu0 %2870
  %2872 = vrot.lane.b32.xlu0 %v2732, 32
  %v2873 = vpop.permute.xlu0 %2872
  %2874 = vrot.lane.b32.xlu0 %v2733, 32
  %v2875 = vpop.permute.xlu0 %2874
  %2876 = vrot.lane.b32.xlu0 %v2734, 32
  %v2877 = vpop.permute.xlu0 %2876
  %2878 = vrot.lane.b32.xlu0 %v2735, 32
  %v2879 = vpop.permute.xlu0 %2878
  %2880 = vrot.lane.b32.xlu0 %v2736, 32
  %v2881 = vpop.permute.xlu0 %2880
  %2882 = vrot.lane.b32.xlu0 %v2737, 32
  %v2883 = vpop.permute.xlu0 %2882
  %2884 = vrot.lane.b32.xlu0 %v2738, 32
  %v2885 = vpop.permute.xlu0 %2884
  %2886 = vrot.lane.b32.xlu0 %v2739, 32
  %v2887 = vpop.permute.xlu0 %2886
  %2888 = vrot.lane.b32.xlu0 %v2740, 32
  %v2889 = vpop.permute.xlu0 %2888
  %2890 = vrot.lane.b32.xlu0 %v2741, 32
  %v2891 = vpop.permute.xlu0 %2890
  %2892 = vrot.lane.b32.xlu0 %v2742, 32
  %v2893 = vpop.permute.xlu0 %2892
  %2894 = vrot.lane.b32.xlu0 %v2743, 32
  %v2895 = vpop.permute.xlu0 %2894
  %2896 = vrot.lane.b32.xlu0 %v2744, 32
  %v2897 = vpop.permute.xlu0 %2896
  %2898 = vrot.lane.b32.xlu0 %v2745, 32
  %v2899 = vpop.permute.xlu0 %2898
  %2900 = vrot.lane.b32.xlu0 %v2746, 32
  %v2901 = vpop.permute.xlu0 %2900
  %2902 = vrot.lane.b32.xlu0 %v2747, 32
  %v2903 = vpop.permute.xlu0 %2902
  %2904 = vrot.lane.b32.xlu0 %v2748, 32
  %v2905 = vpop.permute.xlu0 %2904
  %2906 = vrot.lane.b32.xlu0 %v2749, 32
  %v2907 = vpop.permute.xlu0 %2906
  %2908 = vrot.lane.b32.xlu0 %v2750, 32
  %v2909 = vpop.permute.xlu0 %2908
  %2910 = vrot.lane.b32.xlu0 %v2751, 32
  %v2911 = vpop.permute.xlu0 %2910
  %2912 = vrot.lane.b32.xlu0 %v2752, 32
  %v2913 = vpop.permute.xlu0 %2912
  %2914 = vrot.lane.b32.xlu0 %v2753, 32
  %v2915 = vpop.permute.xlu0 %2914
  %2916 = vrot.lane.b32.xlu0 %v2754, 32
  %v2917 = vpop.permute.xlu0 %2916
  %2918 = vrot.lane.b32.xlu0 %v2755, 32
  %v2919 = vpop.permute.xlu0 %2918
  %2920 = vrot.lane.b32.xlu0 %v2756, 32
  %v2921 = vpop.permute.xlu0 %2920
  %2922 = vrot.lane.b32.xlu0 %v2757, 32
  %v2923 = vpop.permute.xlu0 %2922
  %2924 = vrot.lane.b32.xlu0 %v2758, 32
  %v2925 = vpop.permute.xlu0 %2924
  %2926 = vrot.lane.b32.xlu0 %v2759, 32
  %v2927 = vpop.permute.xlu0 %2926
  %2928 = vrot.lane.b32.xlu0 %v2760, 32
  %v2929 = vpop.permute.xlu0 %2928
  %2930 = vrot.lane.b32.xlu0 %v2761, 32
  %v2931 = vpop.permute.xlu0 %2930
  %2932 = vrot.lane.b32.xlu0 %v2762, 32
  %v2933 = vpop.permute.xlu0 %2932
  %2934 = vrot.lane.b32.xlu0 %v2763, 32
  %v2935 = vpop.permute.xlu0 %2934
  %2936 = vrot.lane.b32.xlu0 %v2764, 32
  %v2937 = vpop.permute.xlu0 %2936
  %2938 = vrot.lane.b32.xlu0 %v2765, 32
  %v2939 = vpop.permute.xlu0 %2938
  %2940 = vrot.lane.b32.xlu0 %v2766, 32
  %v2941 = vpop.permute.xlu0 %2940
  %2942 = vrot.lane.b32.xlu0 %v2767, 32
  %v2943 = vpop.permute.xlu0 %2942
  %2944 = vrot.lane.b32.xlu0 %v2768, 32
  %v2945 = vpop.permute.xlu0 %2944
  %2946 = vrot.lane.b32.xlu0 %v2769, 32
  %v2947 = vpop.permute.xlu0 %2946
  %2948 = vrot.lane.b32.xlu0 %v2770, 32
  %v2949 = vpop.permute.xlu0 %2948
  %2950 = vrot.lane.b32.xlu0 %v2771, 32
  %v2951 = vpop.permute.xlu0 %2950
  %2952 = vrot.lane.b32.xlu0 %v2772, 32
  %v2953 = vpop.permute.xlu0 %2952
  %2954 = vrot.lane.b32.xlu0 %v2773, 32
  %v2955 = vpop.permute.xlu0 %2954
  %2956 = vrot.lane.b32.xlu0 %v2774, 32
  %v2957 = vpop.permute.xlu0 %2956
  %2958 = vrot.lane.b32.xlu0 %v2775, 32
  %v2959 = vpop.permute.xlu0 %2958
  %2960 = vrot.lane.b32.xlu0 %v2776, 32
  %v2961 = vpop.permute.xlu0 %2960
  %2962 = vrot.lane.b32.xlu0 %v2777, 32
  %v2963 = vpop.permute.xlu0 %2962
  %2964 = vrot.lane.b32.xlu0 %v2778, 32
  %v2965 = vpop.permute.xlu0 %2964
  %2966 = vrot.lane.b32.xlu0 %v2779, 32
  %v2967 = vpop.permute.xlu0 %2966
  %2968 = vrot.lane.b32.xlu0 %v2780, 32
  %v2969 = vpop.permute.xlu0 %2968
  %2970 = vrot.lane.b32.xlu0 %v2781, 32
  %v2971 = vpop.permute.xlu0 %2970
  %2972 = vrot.lane.b32.xlu0 %v2782, 32
  %v2973 = vpop.permute.xlu0 %2972
  %2974 = vrot.lane.b32.xlu0 %v2783, 32
  %v2975 = vpop.permute.xlu0 %2974
  %v3040 = vmul.f32 %v1632, %v2849
  %v3041 = vmul.f32 %v1633, %v2851
  %v3042 = vmul.f32 %v1634, %v2853
  %v3043 = vmul.f32 %v1635, %v2855
  %v3044 = vmul.f32 %v1636, %v2857
  %v3045 = vmul.f32 %v1637, %v2859
  %v3046 = vmul.f32 %v1638, %v2861
  %v3047 = vmul.f32 %v1639, %v2863
  %v3048 = vmul.f32 %v1640, %v2865
  %v3049 = vmul.f32 %v1641, %v2867
  %v3050 = vmul.f32 %v1642, %v2869
  %v3051 = vmul.f32 %v1643, %v2871
  %v3052 = vmul.f32 %v1644, %v2873
  %v3053 = vmul.f32 %v1645, %v2875
  %v3054 = vmul.f32 %v1646, %v2877
  %v3055 = vmul.f32 %v1647, %v2879
  %v3056 = vmul.f32 %v1648, %v2881
  %v3057 = vmul.f32 %v1649, %v2883
  %v3058 = vmul.f32 %v1650, %v2885
  %v3059 = vmul.f32 %v1651, %v2887
  %v3060 = vmul.f32 %v1652, %v2889
  %v3061 = vmul.f32 %v1653, %v2891
  %v3062 = vmul.f32 %v1654, %v2893
  %v3063 = vmul.f32 %v1655, %v2895
  %v3064 = vmul.f32 %v1656, %v2897
  %v3065 = vmul.f32 %v1657, %v2899
  %v3066 = vmul.f32 %v1658, %v2901
  %v3067 = vmul.f32 %v1659, %v2903
  %v3068 = vmul.f32 %v1660, %v2905
  %v3069 = vmul.f32 %v1661, %v2907
  %v3070 = vmul.f32 %v1662, %v2909
  %v3071 = vmul.f32 %v1663, %v2911
  %v3072 = vmul.f32 %v1664, %v2913
  %v3073 = vmul.f32 %v1665, %v2915
  %v3074 = vmul.f32 %v1666, %v2917
  %v3075 = vmul.f32 %v1667, %v2919
  %v3076 = vmul.f32 %v1668, %v2921
  %v3077 = vmul.f32 %v1669, %v2923
  %v3078 = vmul.f32 %v1670, %v2925
  %v3079 = vmul.f32 %v1671, %v2927
  %v3080 = vmul.f32 %v1672, %v2929
  %v3081 = vmul.f32 %v1673, %v2931
  %v3082 = vmul.f32 %v1674, %v2933
  %v3083 = vmul.f32 %v1675, %v2935
  %v3084 = vmul.f32 %v1676, %v2937
  %v3085 = vmul.f32 %v1677, %v2939
  %v3086 = vmul.f32 %v1678, %v2941
  %v3087 = vmul.f32 %v1679, %v2943
  %v3088 = vmul.f32 %v1680, %v2945
  %v3089 = vmul.f32 %v1681, %v2947
  %v3090 = vmul.f32 %v1682, %v2949
  %v3091 = vmul.f32 %v1683, %v2951
  %v3092 = vmul.f32 %v1684, %v2953
  %v3093 = vmul.f32 %v1685, %v2955
  %v3094 = vmul.f32 %v1686, %v2957
  %v3095 = vmul.f32 %v1687, %v2959
  %v3096 = vmul.f32 %v1688, %v2961
  %v3097 = vmul.f32 %v1689, %v2963
  %v3098 = vmul.f32 %v1690, %v2965
  %v3099 = vmul.f32 %v1691, %v2967
  %v3100 = vmul.f32 %v1692, %v2969
  %v3101 = vmul.f32 %v1693, %v2971
  %v3102 = vmul.f32 %v1694, %v2973
  %v3103 = vmul.f32 %v1695, %v2975
  %3168 = vrot.lane.b32.xlu0 %v3040, 64
  %v3169 = vpop.permute.xlu0 %3168
  %3170 = vrot.lane.b32.xlu0 %v3041, 64
  %v3171 = vpop.permute.xlu0 %3170
  %3172 = vrot.lane.b32.xlu0 %v3042, 64
  %v3173 = vpop.permute.xlu0 %3172
  %3174 = vrot.lane.b32.xlu0 %v3043, 64
  %v3175 = vpop.permute.xlu0 %3174
  %3176 = vrot.lane.b32.xlu0 %v3044, 64
  %v3177 = vpop.permute.xlu0 %3176
  %3178 = vrot.lane.b32.xlu0 %v3045, 64
  %v3179 = vpop.permute.xlu0 %3178
  %3180 = vrot.lane.b32.xlu0 %v3046, 64
  %v3181 = vpop.permute.xlu0 %3180
  %3182 = vrot.lane.b32.xlu0 %v3047, 64
  %v3183 = vpop.permute.xlu0 %3182
  %3184 = vrot.lane.b32.xlu0 %v3048, 64
  %v3185 = vpop.permute.xlu0 %3184
  %3186 = vrot.lane.b32.xlu0 %v3049, 64
  %v3187 = vpop.permute.xlu0 %3186
  %3188 = vrot.lane.b32.xlu0 %v3050, 64
  %v3189 = vpop.permute.xlu0 %3188
  %3190 = vrot.lane.b32.xlu0 %v3051, 64
  %v3191 = vpop.permute.xlu0 %3190
  %3192 = vrot.lane.b32.xlu0 %v3052, 64
  %v3193 = vpop.permute.xlu0 %3192
  %3194 = vrot.lane.b32.xlu0 %v3053, 64
  %v3195 = vpop.permute.xlu0 %3194
  %3196 = vrot.lane.b32.xlu0 %v3054, 64
  %v3197 = vpop.permute.xlu0 %3196
  %3198 = vrot.lane.b32.xlu0 %v3055, 64
  %v3199 = vpop.permute.xlu0 %3198
  %3200 = vrot.lane.b32.xlu0 %v3056, 64
  %v3201 = vpop.permute.xlu0 %3200
  %3202 = vrot.lane.b32.xlu0 %v3057, 64
  %v3203 = vpop.permute.xlu0 %3202
  %3204 = vrot.lane.b32.xlu0 %v3058, 64
  %v3205 = vpop.permute.xlu0 %3204
  %3206 = vrot.lane.b32.xlu0 %v3059, 64
  %v3207 = vpop.permute.xlu0 %3206
  %3208 = vrot.lane.b32.xlu0 %v3060, 64
  %v3209 = vpop.permute.xlu0 %3208
  %3210 = vrot.lane.b32.xlu0 %v3061, 64
  %v3211 = vpop.permute.xlu0 %3210
  %3212 = vrot.lane.b32.xlu0 %v3062, 64
  %v3213 = vpop.permute.xlu0 %3212
  %3214 = vrot.lane.b32.xlu0 %v3063, 64
  %v3215 = vpop.permute.xlu0 %3214
  %3216 = vrot.lane.b32.xlu0 %v3064, 64
  %v3217 = vpop.permute.xlu0 %3216
  %3218 = vrot.lane.b32.xlu0 %v3065, 64
  %v3219 = vpop.permute.xlu0 %3218
  %3220 = vrot.lane.b32.xlu0 %v3066, 64
  %v3221 = vpop.permute.xlu0 %3220
  %3222 = vrot.lane.b32.xlu0 %v3067, 64
  %v3223 = vpop.permute.xlu0 %3222
  %3224 = vrot.lane.b32.xlu0 %v3068, 64
  %v3225 = vpop.permute.xlu0 %3224
  %3226 = vrot.lane.b32.xlu0 %v3069, 64
  %v3227 = vpop.permute.xlu0 %3226
  %3228 = vrot.lane.b32.xlu0 %v3070, 64
  %v3229 = vpop.permute.xlu0 %3228
  %3230 = vrot.lane.b32.xlu0 %v3071, 64
  %v3231 = vpop.permute.xlu0 %3230
  %3232 = vrot.lane.b32.xlu0 %v3072, 64
  %v3233 = vpop.permute.xlu0 %3232
  %3234 = vrot.lane.b32.xlu0 %v3073, 64
  %v3235 = vpop.permute.xlu0 %3234
  %3236 = vrot.lane.b32.xlu0 %v3074, 64
  %v3237 = vpop.permute.xlu0 %3236
  %3238 = vrot.lane.b32.xlu0 %v3075, 64
  %v3239 = vpop.permute.xlu0 %3238
  %3240 = vrot.lane.b32.xlu0 %v3076, 64
  %v3241 = vpop.permute.xlu0 %3240
  %3242 = vrot.lane.b32.xlu0 %v3077, 64
  %v3243 = vpop.permute.xlu0 %3242
  %3244 = vrot.lane.b32.xlu0 %v3078, 64
  %v3245 = vpop.permute.xlu0 %3244
  %3246 = vrot.lane.b32.xlu0 %v3079, 64
  %v3247 = vpop.permute.xlu0 %3246
  %3248 = vrot.lane.b32.xlu0 %v3080, 64
  %v3249 = vpop.permute.xlu0 %3248
  %3250 = vrot.lane.b32.xlu0 %v3081, 64
  %v3251 = vpop.permute.xlu0 %3250
  %3252 = vrot.lane.b32.xlu0 %v3082, 64
  %v3253 = vpop.permute.xlu0 %3252
  %3254 = vrot.lane.b32.xlu0 %v3083, 64
  %v3255 = vpop.permute.xlu0 %3254
  %3256 = vrot.lane.b32.xlu0 %v3084, 64
  %v3257 = vpop.permute.xlu0 %3256
  %3258 = vrot.lane.b32.xlu0 %v3085, 64
  %v3259 = vpop.permute.xlu0 %3258
  %3260 = vrot.lane.b32.xlu0 %v3086, 64
  %v3261 = vpop.permute.xlu0 %3260
  %3262 = vrot.lane.b32.xlu0 %v3087, 64
  %v3263 = vpop.permute.xlu0 %3262
  %3264 = vrot.lane.b32.xlu0 %v3088, 64
  %v3265 = vpop.permute.xlu0 %3264
  %3266 = vrot.lane.b32.xlu0 %v3089, 64
  %v3267 = vpop.permute.xlu0 %3266
  %3268 = vrot.lane.b32.xlu0 %v3090, 64
  %v3269 = vpop.permute.xlu0 %3268
  %3270 = vrot.lane.b32.xlu0 %v3091, 64
  %v3271 = vpop.permute.xlu0 %3270
  %3272 = vrot.lane.b32.xlu0 %v3092, 64
  %v3273 = vpop.permute.xlu0 %3272
  %3274 = vrot.lane.b32.xlu0 %v3093, 64
  %v3275 = vpop.permute.xlu0 %3274
  %3276 = vrot.lane.b32.xlu0 %v3094, 64
  %v3277 = vpop.permute.xlu0 %3276
  %3278 = vrot.lane.b32.xlu0 %v3095, 64
  %v3279 = vpop.permute.xlu0 %3278
  %3280 = vrot.lane.b32.xlu0 %v3096, 64
  %v3281 = vpop.permute.xlu0 %3280
  %3282 = vrot.lane.b32.xlu0 %v3097, 64
  %v3283 = vpop.permute.xlu0 %3282
  %3284 = vrot.lane.b32.xlu0 %v3098, 64
  %v3285 = vpop.permute.xlu0 %3284
  %3286 = vrot.lane.b32.xlu0 %v3099, 64
  %v3287 = vpop.permute.xlu0 %3286
  %3288 = vrot.lane.b32.xlu0 %v3100, 64
  %v3289 = vpop.permute.xlu0 %3288
  %3290 = vrot.lane.b32.xlu0 %v3101, 64
  %v3291 = vpop.permute.xlu0 %3290
  %3292 = vrot.lane.b32.xlu0 %v3102, 64
  %v3293 = vpop.permute.xlu0 %3292
  %3294 = vrot.lane.b32.xlu0 %v3103, 64
  %v3295 = vpop.permute.xlu0 %3294
  %vm3360 = vcmask 261120
  %v3361 = vsel %vm3360, %v3169, %v2656
  %v3362 = vsel %vm3360, %v3171, %v2657
  %v3363 = vsel %vm3360, %v3173, %v2658
  %v3364 = vsel %vm3360, %v3175, %v2659
  %v3365 = vsel %vm3360, %v3177, %v2660
  %v3366 = vsel %vm3360, %v3179, %v2661
  %v3367 = vsel %vm3360, %v3181, %v2662
  %v3368 = vsel %vm3360, %v3183, %v2663
  %v3369 = vsel %vm3360, %v3185, %v2664
  %v3370 = vsel %vm3360, %v3187, %v2665
  %v3371 = vsel %vm3360, %v3189, %v2666
  %v3372 = vsel %vm3360, %v3191, %v2667
  %v3373 = vsel %vm3360, %v3193, %v2668
  %v3374 = vsel %vm3360, %v3195, %v2669
  %v3375 = vsel %vm3360, %v3197, %v2670
  %v3376 = vsel %vm3360, %v3199, %v2671
  %v3377 = vsel %vm3360, %v3201, %v2672
  %v3378 = vsel %vm3360, %v3203, %v2673
  %v3379 = vsel %vm3360, %v3205, %v2674
  %v3380 = vsel %vm3360, %v3207, %v2675
  %v3381 = vsel %vm3360, %v3209, %v2676
  %v3382 = vsel %vm3360, %v3211, %v2677
  %v3383 = vsel %vm3360, %v3213, %v2678
  %v3384 = vsel %vm3360, %v3215, %v2679
  %v3385 = vsel %vm3360, %v3217, %v2680
  %v3386 = vsel %vm3360, %v3219, %v2681
  %v3387 = vsel %vm3360, %v3221, %v2682
  %v3388 = vsel %vm3360, %v3223, %v2683
  %v3389 = vsel %vm3360, %v3225, %v2684
  %v3390 = vsel %vm3360, %v3227, %v2685
  %v3391 = vsel %vm3360, %v3229, %v2686
  %v3392 = vsel %vm3360, %v3231, %v2687
  %v3393 = vsel %vm3360, %v3233, %v2688
  %v3394 = vsel %vm3360, %v3235, %v2689
  %v3395 = vsel %vm3360, %v3237, %v2690
  %v3396 = vsel %vm3360, %v3239, %v2691
  %v3397 = vsel %vm3360, %v3241, %v2692
  %v3398 = vsel %vm3360, %v3243, %v2693
  %v3399 = vsel %vm3360, %v3245, %v2694
  %v3400 = vsel %vm3360, %v3247, %v2695
  %v3401 = vsel %vm3360, %v3249, %v2696
  %v3402 = vsel %vm3360, %v3251, %v2697
  %v3403 = vsel %vm3360, %v3253, %v2698
  %v3404 = vsel %vm3360, %v3255, %v2699
  %v3405 = vsel %vm3360, %v3257, %v2700
  %v3406 = vsel %vm3360, %v3259, %v2701
  %v3407 = vsel %vm3360, %v3261, %v2702
  %v3408 = vsel %vm3360, %v3263, %v2703
  %v3409 = vsel %vm3360, %v3265, %v2704
  %v3410 = vsel %vm3360, %v3267, %v2705
  %v3411 = vsel %vm3360, %v3269, %v2706
  %v3412 = vsel %vm3360, %v3271, %v2707
  %v3413 = vsel %vm3360, %v3273, %v2708
  %v3414 = vsel %vm3360, %v3275, %v2709
  %v3415 = vsel %vm3360, %v3277, %v2710
  %v3416 = vsel %vm3360, %v3279, %v2711
  %v3417 = vsel %vm3360, %v3281, %v2712
  %v3418 = vsel %vm3360, %v3283, %v2713
  %v3419 = vsel %vm3360, %v3285, %v2714
  %v3420 = vsel %vm3360, %v3287, %v2715
  %v3421 = vsel %vm3360, %v3289, %v2716
  %v3422 = vsel %vm3360, %v3291, %v2717
  %v3423 = vsel %vm3360, %v3293, %v2718
  %v3424 = vsel %vm3360, %v3295, %v2719
  %vm3425 = vcmask 523264
  %v3426 = vsel %vm3425, %v3361, %v1632
  %v3427 = vsel %vm3425, %v3362, %v1633
  %v3428 = vsel %vm3425, %v3363, %v1634
  %v3429 = vsel %vm3425, %v3364, %v1635
  %v3430 = vsel %vm3425, %v3365, %v1636
  %v3431 = vsel %vm3425, %v3366, %v1637
  %v3432 = vsel %vm3425, %v3367, %v1638
  %v3433 = vsel %vm3425, %v3368, %v1639
  %v3434 = vsel %vm3425, %v3369, %v1640
  %v3435 = vsel %vm3425, %v3370, %v1641
  %v3436 = vsel %vm3425, %v3371, %v1642
  %v3437 = vsel %vm3425, %v3372, %v1643
  %v3438 = vsel %vm3425, %v3373, %v1644
  %v3439 = vsel %vm3425, %v3374, %v1645
  %v3440 = vsel %vm3425, %v3375, %v1646
  %v3441 = vsel %vm3425, %v3376, %v1647
  %v3442 = vsel %vm3425, %v3377, %v1648
  %v3443 = vsel %vm3425, %v3378, %v1649
  %v3444 = vsel %vm3425, %v3379, %v1650
  %v3445 = vsel %vm3425, %v3380, %v1651
  %v3446 = vsel %vm3425, %v3381, %v1652
  %v3447 = vsel %vm3425, %v3382, %v1653
  %v3448 = vsel %vm3425, %v3383, %v1654
  %v3449 = vsel %vm3425, %v3384, %v1655
  %v3450 = vsel %vm3425, %v3385, %v1656
  %v3451 = vsel %vm3425, %v3386, %v1657
  %v3452 = vsel %vm3425, %v3387, %v1658
  %v3453 = vsel %vm3425, %v3388, %v1659
  %v3454 = vsel %vm3425, %v3389, %v1660
  %v3455 = vsel %vm3425, %v3390, %v1661
  %v3456 = vsel %vm3425, %v3391, %v1662
  %v3457 = vsel %vm3425, %v3392, %v1663
  %v3458 = vsel %vm3425, %v3393, %v1664
  %v3459 = vsel %vm3425, %v3394, %v1665
  %v3460 = vsel %vm3425, %v3395, %v1666
  %v3461 = vsel %vm3425, %v3396, %v1667
  %v3462 = vsel %vm3425, %v3397, %v1668
  %v3463 = vsel %vm3425, %v3398, %v1669
  %v3464 = vsel %vm3425, %v3399, %v1670
  %v3465 = vsel %vm3425, %v3400, %v1671
  %v3466 = vsel %vm3425, %v3401, %v1672
  %v3467 = vsel %vm3425, %v3402, %v1673
  %v3468 = vsel %vm3425, %v3403, %v1674
  %v3469 = vsel %vm3425, %v3404, %v1675
  %v3470 = vsel %vm3425, %v3405, %v1676
  %v3471 = vsel %vm3425, %v3406, %v1677
  %v3472 = vsel %vm3425, %v3407, %v1678
  %v3473 = vsel %vm3425, %v3408, %v1679
  %v3474 = vsel %vm3425, %v3409, %v1680
  %v3475 = vsel %vm3425, %v3410, %v1681
  %v3476 = vsel %vm3425, %v3411, %v1682
  %v3477 = vsel %vm3425, %v3412, %v1683
  %v3478 = vsel %vm3425, %v3413, %v1684
  %v3479 = vsel %vm3425, %v3414, %v1685
  %v3480 = vsel %vm3425, %v3415, %v1686
  %v3481 = vsel %vm3425, %v3416, %v1687
  %v3482 = vsel %vm3425, %v3417, %v1688
  %v3483 = vsel %vm3425, %v3418, %v1689
  %v3484 = vsel %vm3425, %v3419, %v1690
  %v3485 = vsel %vm3425, %v3420, %v1691
  %v3486 = vsel %vm3425, %v3421, %v1692
  %v3487 = vsel %vm3425, %v3422, %v1693
  %v3488 = vsel %vm3425, %v3423, %v1694
  %v3489 = vsel %vm3425, %v3424, %v1695
  %3490 = vst [vmem:[%s4] sm:$0xff] %v3426
  %3491 = vst [vmem:[%s4 + $0x8] sm:$0xff] %v3427
  %3492 = vst [vmem:[%s4 + $0x10] sm:$0xff] %v3428
  %3493 = vst [vmem:[%s4 + $0x18] sm:$0xff] %v3429
  %3494 = vst [vmem:[%s4 + $0x20] sm:$0xff] %v3430
  %3495 = vst [vmem:[%s4 + $0x28] sm:$0xff] %v3431
  %3496 = vst [vmem:[%s4 + $0x30] sm:$0xff] %v3432
  %3497 = vst [vmem:[%s4 + $0x38] sm:$0xff] %v3433
  %3498 = vst [vmem:[%s4 + $0x40] sm:$0xff] %v3434
  %3499 = vst [vmem:[%s4 + $0x48] sm:$0xff] %v3435
  %3500 = vst [vmem:[%s4 + $0x50] sm:$0xff] %v3436
  %3501 = vst [vmem:[%s4 + $0x58] sm:$0xff] %v3437
  %3502 = vst [vmem:[%s4 + $0x60] sm:$0xff] %v3438
  %3503 = vst [vmem:[%s4 + $0x68] sm:$0xff] %v3439
  %3504 = vst [vmem:[%s4 + $0x70] sm:$0xff] %v3440
  %3505 = vst [vmem:[%s4 + $0x78] sm:$0xff] %v3441
  %3506 = vst [vmem:[%s4 + $0x80] sm:$0xff] %v3442
  %3507 = vst [vmem:[%s4 + $0x88] sm:$0xff] %v3443
  %3508 = vst [vmem:[%s4 + $0x90] sm:$0xff] %v3444
  %3509 = vst [vmem:[%s4 + $0x98] sm:$0xff] %v3445
  %3510 = vst [vmem:[%s4 + $0xa0] sm:$0xff] %v3446
  %3511 = vst [vmem:[%s4 + $0xa8] sm:$0xff] %v3447
  %3512 = vst [vmem:[%s4 + $0xb0] sm:$0xff] %v3448
  %3513 = vst [vmem:[%s4 + $0xb8] sm:$0xff] %v3449
  %3514 = vst [vmem:[%s4 + $0xc0] sm:$0xff] %v3450
  %3515 = vst [vmem:[%s4 + $0xc8] sm:$0xff] %v3451
  %3516 = vst [vmem:[%s4 + $0xd0] sm:$0xff] %v3452
  %3517 = vst [vmem:[%s4 + $0xd8] sm:$0xff] %v3453
  %3518 = vst [vmem:[%s4 + $0xe0] sm:$0xff] %v3454
  %3519 = vst [vmem:[%s4 + $0xe8] sm:$0xff] %v3455
  %3520 = vst [vmem:[%s4 + $0xf0] sm:$0xff] %v3456
  %3521 = vst [vmem:[%s4 + $0xf8] sm:$0xff] %v3457
  %3522 = vst [vmem:[%s4 + $0x100] sm:$0xff] %v3458
  %3523 = vst [vmem:[%s4 + $0x108] sm:$0xff] %v3459
  %3524 = vst [vmem:[%s4 + $0x110] sm:$0xff] %v3460
  %3525 = vst [vmem:[%s4 + $0x118] sm:$0xff] %v3461
  %3526 = vst [vmem:[%s4 + $0x120] sm:$0xff] %v3462
  %3527 = vst [vmem:[%s4 + $0x128] sm:$0xff] %v3463
  %3528 = vst [vmem:[%s4 + $0x130] sm:$0xff] %v3464
  %3529 = vst [vmem:[%s4 + $0x138] sm:$0xff] %v3465
  %3530 = vst [vmem:[%s4 + $0x140] sm:$0xff] %v3466
  %3531 = vst [vmem:[%s4 + $0x148] sm:$0xff] %v3467
  %3532 = vst [vmem:[%s4 + $0x150] sm:$0xff] %v3468
  %3533 = vst [vmem:[%s4 + $0x158] sm:$0xff] %v3469
  %3534 = vst [vmem:[%s4 + $0x160] sm:$0xff] %v3470
  %3535 = vst [vmem:[%s4 + $0x168] sm:$0xff] %v3471
  %3536 = vst [vmem:[%s4 + $0x170] sm:$0xff] %v3472
  %3537 = vst [vmem:[%s4 + $0x178] sm:$0xff] %v3473
  %3538 = vst [vmem:[%s4 + $0x180] sm:$0xff] %v3474
  %3539 = vst [vmem:[%s4 + $0x188] sm:$0xff] %v3475
  %3540 = vst [vmem:[%s4 + $0x190] sm:$0xff] %v3476
  %3541 = vst [vmem:[%s4 + $0x198] sm:$0xff] %v3477
  %3542 = vst [vmem:[%s4 + $0x1a0] sm:$0xff] %v3478
  %3543 = vst [vmem:[%s4 + $0x1a8] sm:$0xff] %v3479
  %3544 = vst [vmem:[%s4 + $0x1b0] sm:$0xff] %v3480
  %3545 = vst [vmem:[%s4 + $0x1b8] sm:$0xff] %v3481
  %3546 = vst [vmem:[%s4 + $0x1c0] sm:$0xff] %v3482
  %3547 = vst [vmem:[%s4 + $0x1c8] sm:$0xff] %v3483
  %3548 = vst [vmem:[%s4 + $0x1d0] sm:$0xff] %v3484
  %3549 = vst [vmem:[%s4 + $0x1d8] sm:$0xff] %v3485
  %3550 = vst [vmem:[%s4 + $0x1e0] sm:$0xff] %v3486
  %3551 = vst [vmem:[%s4 + $0x1e8] sm:$0xff] %v3487
  %3552 = vst [vmem:[%s4 + $0x1f0] sm:$0xff] %v3488
  %3553 = vst [vmem:[%s4 + $0x1f8] sm:$0xff] %v3489
  // Predicated region
  $region18: #{conv_lstm_cell_forward.1} parent=0 // pred_check
    _
  $region19: #{conv_lstm_cell_forward.1} parent=0 // pred_check_branch
    %3555 = sbr.rel (0) target = $region21
  $region20: #{conv_lstm_cell_forward.1} parent=0 // pred_region
    _
  $region21: #{conv_lstm_cell_forward.1} parent=0 // pred_fallthru
    _
  // Predicated region
  $region22: #{conv_lstm_cell_forward.1} parent=0 // pred_check
    _
  $region23: #{conv_lstm_cell_forward.1} parent=0 // pred_check_branch
    %3557 = sbr.rel (0) target = $region25
  $region24: #{conv_lstm_cell_forward.1} parent=0 // pred_region
    _
  $region25: #{conv_lstm_cell_forward.1} parent=0 // pred_fallthru
    _

</llo_original>
